<compile_context>
chip_gen: v5e
topology: v5e:2x2
jax: 0.10.0
libtpu: 0.0.40
codegen_flags: <defaults>
</compile_context>

<pallas_src>
import jax
import jax.numpy as jnp
from jax.experimental import pallas as pl
from jax.experimental.pallas import tpu as pltpu

_LANE = 128
_BN_EPS = 1e-5


# ------------------------------- small helpers ------------------------------

def _round_up(n, m):
    return ((n + m - 1) // m) * m


def _pad_axis(x, axis, target):
    pad = target - x.shape[axis]
    if pad <= 0:
        return x
    widths = [(0, 0)] * x.ndim
    widths[axis] = (0, pad)
    return jnp.pad(x, widths)


def _choose_row_tile(m):
    """Row tile tm and padded row count mp (mp % tm == 0).

    512-1024 row tiles reach ~85% of the HBM roofline (vs ~63% at 256); for
    small problems the whole row dim becomes a single tile.
    """
    if m <= 1024:
        tm = _round_up(m, 8)
        return tm, tm
    for tm in (1024, 512, 256):
        if m % tm == 0:
            return tm, m
    tm = 512
    return tm, _round_up(m, tm)


def _row_index_map(tiles_per_core):
    def imap(c, j):
        return (c * tiles_per_core + j, 0)
    return imap


# ----------------------------- Pallas kernels --------------------------------

def _matmul_bias_kernel(x_ref, w_ref, b_ref, o_ref):
    # o = x @ w + b   (1x1 "cnn" conv as a row-tiled matmul, true-Cout output)
    acc = jnp.dot(x_ref[...], w_ref[...], preferred_element_type=jnp.float32)
    o_ref[...] = (acc + b_ref[...]).astype(o_ref.dtype)


def _conv_stats_kernel(p_ref, w_ref, y_ref, sum_ref, sumsq_ref):
    # Pass 1 of conv+BN: tiled im2col matmul (no bias -- training-mode BN
    # cancels it).  y is stored in bf16; per-channel sum / sumsq are
    # accumulated in f32 into a per-core stats block that stays resident
    # across the inner ("arbitrary") row-tile axis.
    y = jnp.dot(p_ref[...], w_ref[...], preferred_element_type=jnp.float32)
    y_ref[...] = y.astype(y_ref.dtype)

    @pl.when(pl.program_id(1) == 0)
    def _():
        sum_ref[...] = jnp.zeros_like(sum_ref)
        sumsq_ref[...] = jnp.zeros_like(sumsq_ref)

    s = jnp.sum(y, axis=0, keepdims=True)          # (1, Cout) f32
    ss = jnp.sum(y * y, axis=0, keepdims=True)
    sum_ref[0:1, :] = sum_ref[0:1, :] + s
    sumsq_ref[0:1, :] = sumsq_ref[0:1, :] + ss


def _bn_relu_kernel(y_ref, scale_ref, shift_ref, o_ref):
    # Pass 2 of conv+BN: y * scale + shift, then ReLU (scale/shift fold the
    # batch statistics and BN affine parameters).  Output aliases y.
    o_ref[...] = jnp.maximum(
        y_ref[...] * scale_ref[...] + shift_ref[...], 0.0
    ).astype(o_ref.dtype)


def _mlp_head_kernel(x_ref, w1_ref, b1_ref, w2_ref, b2_ref, noise_ref,
                     z_ref, mu_ref, sigma_ref, h_acc):
    # Linear(feat->hidden) with the feat (K) axis tiled on the grid and an f32
    # VMEM accumulator; on the last K tile: ReLU -> Linear(hidden->2L) ->
    # split mu / exp(log-sigma) -> z = mu + noise * sigma.
    k = pl.program_id(0)

    @pl.when(k == 0)
    def _():
        h_acc[...] = jnp.zeros_like(h_acc)

    h_acc[...] += jnp.dot(x_ref[...], w1_ref[...],
                          preferred_element_type=jnp.float32)

    @pl.when(k == pl.num_programs(0) - 1)
    def _():
        h = jnp.maximum(h_acc[...] + b1_ref[...], 0.0).astype(jnp.bfloat16)
        y2 = jnp.dot(h, w2_ref[...], preferred_element_type=jnp.float32)
        y2 = y2 + b2_ref[...]
        lp = mu_ref.shape[1]
        mu = y2[:, :lp]
        sigma = jnp.exp(y2[:, lp:])
        mu_ref[...] = mu
        sigma_ref[...] = sigma
        z_ref[...] = mu + noise_ref[...] * sigma


# ------------------------------ kernel callers --------------------------------

def conv1x1(x_mat, w, b):
    m, kdim = x_mat.shape
    cout = w.shape[1]
    tm, mp = _choose_row_tile(m)
    x_mat = _pad_axis(x_mat, 0, mp)
    grid = (mp // tm,)
    out = pl.pallas_call(
        _matmul_bias_kernel,
        out_shape=jax.ShapeDtypeStruct((mp, cout), jnp.bfloat16),
        grid=grid,
        in_specs=[pl.BlockSpec((tm, kdim), lambda i: (i, 0)),
                  pl.BlockSpec((kdim, cout), lambda i: (0, 0)),
                  pl.BlockSpec((1, cout), lambda i: (0, 0))],
        out_specs=pl.BlockSpec((tm, cout), lambda i: (i, 0)),
        compiler_params=pltpu.CompilerParams(
            dimension_semantics=("parallel",)),
    )(x_mat, w, b)
    return out if mp == m else out[:m]


def conv_bn_relu(patches, w_mat, gamma, beta):
    """conv3x3 (as im2col matmul) + whole-batch BatchNorm + ReLU, two passes."""
    m, kdim = patches.shape
    cout = w_mat.shape[1]
    tm, mp = _choose_row_tile(m)
    patches = _pad_axis(patches, 0, mp)   # zero rows: no effect on the sums
    tiles = mp // tm
    # v7x: split the stats pass over both TensorCores when there is work for
    # two (each core owns its own partial-stat rows); no effect on v5e/v6e.
    ncores = 2 if (tiles >= 2 and tiles % 2 == 0) else 1
    tpc = tiles // ncores

    y, ysum, ysumsq = pl.pallas_call(
        _conv_stats_kernel,
        out_shape=(jax.ShapeDtypeStruct((mp, cout), jnp.bfloat16),
                   jax.ShapeDtypeStruct((8 * ncores, cout), jnp.float32),
                   jax.ShapeDtypeStruct((8 * ncores, cout), jnp.float32)),
        grid=(ncores, tpc),
        in_specs=[pl.BlockSpec((tm, kdim), _row_index_map(tpc)),
                  pl.BlockSpec((kdim, cout), lambda c, j: (0, 0))],
        out_specs=(pl.BlockSpec((tm, cout), _row_index_map(tpc)),
                   pl.BlockSpec((8, cout), lambda c, j: (c, 0)),
                   pl.BlockSpec((8, cout), lambda c, j: (c, 0))),
        compiler_params=pltpu.CompilerParams(
            dimension_semantics=("parallel", "arbitrary")),
    )(patches, w_mat)

    # Fold batch statistics + BN affine into per-channel scale/shift (tiny
    # (Cout,)-sized XLA ops).  Exact whole-batch training-mode BN.
    inv_m = 1.0 / float(m)
    mean = jnp.sum(ysum, axis=0) * inv_m
    var = jnp.maximum(jnp.sum(ysumsq, axis=0) * inv_m - mean * mean, 0.0)
    scale = gamma * jax.lax.rsqrt(var + _BN_EPS)
    shift = beta - mean * scale

    out = pl.pallas_call(
        _bn_relu_kernel,
        out_shape=jax.ShapeDtypeStruct((mp, cout), jnp.bfloat16),
        grid=(tiles,),
        in_specs=[pl.BlockSpec((tm, cout), lambda i: (i, 0)),
                  pl.BlockSpec((1, cout), lambda i: (0, 0)),
                  pl.BlockSpec((1, cout), lambda i: (0, 0))],
        out_specs=pl.BlockSpec((tm, cout), lambda i: (i, 0)),
        input_output_aliases={0: 0},   # write BN+ReLU result in place of y
        compiler_params=pltpu.CompilerParams(
            dimension_semantics=("parallel",)),
    )(y, scale[None, :], shift[None, :])
    return out if mp == m else out[:m]


def mlp_head(feat, w1, b1, w2, b2, noise_p):
    bsz, featp = feat.shape
    hp = w1.shape[1]
    lp = noise_p.shape[1]
    tk = featp
    for cand in (2048, 1024, 512, 256, 128):
        if featp % cand == 0:
            tk = cand
            break
    nk = featp // tk
    if nk >= 3:
        # Deep K grid: triple-buffer the dominant w1 stream.
        w1_spec = pl.BlockSpec((tk, hp), lambda k: (k, 0),
                               pipeline_mode=pl.Buffered(3))
    else:
        w1_spec = pl.BlockSpec((tk, hp), lambda k: (k, 0))

    out_shape = tuple(jax.ShapeDtypeStruct((bsz, lp), jnp.float32)
                      for _ in range(3))
    z, mu, sigma = pl.pallas_call(
        _mlp_head_kernel,
        out_shape=out_shape,
        grid=(nk,),
        in_specs=[pl.BlockSpec((bsz, tk), lambda k: (0, k)),
                  w1_spec,
                  pl.BlockSpec((1, hp), lambda k: (0, 0)),
                  pl.BlockSpec((hp, 2 * lp), lambda k: (0, 0)),
                  pl.BlockSpec((1, 2 * lp), lambda k: (0, 0)),
                  pl.BlockSpec((bsz, lp), lambda k: (0, 0))],
        out_specs=tuple(pl.BlockSpec((bsz, lp), lambda k: (0, 0))
                        for _ in range(3)),
        scratch_shapes=[pltpu.VMEM((bsz, hp), jnp.float32)],
        compiler_params=pltpu.CompilerParams(
            dimension_semantics=("arbitrary",)),
    )(feat, w1, b1, w2, b2, noise_p)
    return z, mu, sigma


# ----------------------------------- glue ------------------------------------

def _im2col_3x3_s2(x_nhwc):
    """3x3 / stride-2 / pad-1 conv -> patch matrix (B*Ho*Wo, 9*Cin).

    Column order is (kh, kw, Cin), matching weights reshaped from PyTorch
    (Cout, Cin, kh, kw) via transpose(2, 3, 1, 0).
    """
    # TODO(synk): the 9x patch inflation still happens in XLA/HBM; the next
    # step per the perf review is a manual-DMA Pallas 3x3/s2 kernel
    # (memory_space=pl.ANY input, row-band async copies, 9 shifted matmuls)
    # with the previous layer's BN apply + ReLU fused into patch generation.
    b, h, w, c = x_nhwc.shape
    ho, wo = h // 2, w // 2
    xp = jnp.pad(x_nhwc, ((0, 0), (1, 1), (1, 1), (0, 0)))
    cols = []
    for dh in range(3):
        for dw in range(3):
            cols.append(xp[:, dh:dh + 2 * ho:2, dw:dw + 2 * wo:2, :])
    patches = jnp.stack(cols, axis=-2)              # (B, Ho, Wo, 9, C)
    return patches.reshape(b * ho * wo, 9 * c), (b, ho, wo)


def init_params(key, img_size, latent_size, start_channels, downsamplings,
                hidden_size, down_channels):
    """Raw parameters in PyTorch layout (Conv2d / BatchNorm2d / Linear)."""
    c = down_channels
    keys = jax.random.split(key, 4 + downsamplings)
    params = {}
    params["cnn_w"] = 0.05 * jax.random.normal(
        keys[0], (c, start_channels, 1, 1), jnp.float32)
    params["cnn_b"] = jnp.zeros((c,), jnp.float32)

    blocks = []
    for i in range(downsamplings):
        cin = c * 2 ** i
        cout = cin * 2
        blocks.append({
            "w": 0.05 * jax.random.normal(keys[1 + i], (cout, cin, 3, 3),
                                          jnp.float32),
            "b": jnp.zeros((cout,), jnp.float32),
            "gamma": jnp.ones((cout,), jnp.float32),
            "beta": jnp.zeros((cout,), jnp.float32),
        })
    params["blocks"] = blocks

    feat = c * img_size ** 2 // 2 ** downsamplings
    params["lin1_w"] = 0.05 * jax.random.normal(
        keys[1 + downsamplings], (hidden_size, feat), jnp.float32)
    params["lin1_b"] = jnp.zeros((hidden_size,), jnp.float32)
    params["lin2_w"] = 0.05 * jax.random.normal(
        keys[2 + downsamplings], (2 * latent_size, hidden_size), jnp.float32)
    params["lin2_b"] = jnp.zeros((2 * latent_size,), jnp.float32)
    return params


def prepare_params(params, img_size, latent_size, downsamplings):
    """Hoist all transposes / reshapes / lane padding / bf16 casts out of the
    hot path (run once)."""
    p = {}
    cnn_w = params["cnn_w"]
    cout0 = cnn_w.shape[0]
    # 1x1 conv emitted unpadded (true Cout) in bf16 NHWC.
    # TODO(synk): folding the 1x1 conv into the first 3x3 weights requires an
    # exact treatment of the zero-padded border when cnn_b != 0; kept separate.
    p["cnn_w"] = cnn_w.reshape(cout0, -1).T.astype(jnp.bfloat16)   # (Cin, Cout)
    p["cnn_b"] = params["cnn_b"][None, :].astype(jnp.float32)

    p["blocks"] = []
    for blk in params["blocks"]:
        cout = blk["w"].shape[0]
        w_mat = jnp.transpose(blk["w"], (2, 3, 1, 0)).reshape(-1, cout)
        p["blocks"].append({
            # NOTE: the conv bias is dropped on purpose -- training-mode
            # BatchNorm subtracts the batch mean, which cancels a per-channel
            # additive bias exactly.
            "w": w_mat.astype(jnp.bfloat16),           # (9*Cin, Cout), unpadded
            "gamma": blk["gamma"].astype(jnp.float32),
            "beta": blk["beta"].astype(jnp.float32),
        })

    hidden, feat = params["lin1_w"].shape
    hp = _round_up(hidden, _LANE)
    featp = _round_up(feat, _LANE)
    lp = _round_up(latent_size, _LANE)
    cout_last = cout0 * 2 ** downsamplings
    hw = img_size // 2 ** downsamplings

    # Permute lin1_w rows from NCHW-flatten order (PyTorch Flatten) to
    # NHWC-flatten order so the forward pass needs no activation transpose.
    w1 = params["lin1_w"].T                              # (feat, hidden), NCHW rows
    w1 = (w1.reshape(cout_last, hw, hw, hidden)
            .transpose(1, 2, 0, 3)
            .reshape(feat, hidden))
    w1 = _pad_axis(_pad_axis(w1, 0, featp), 1, hp)
    p["lin1_w"] = w1.astype(jnp.bfloat16)
    p["lin1_b"] = _pad_axis(params["lin1_b"], 0, hp)[None, :]

    w2 = params["lin2_w"]                                # (2L, hidden)
    wmu = _pad_axis(_pad_axis(w2[:latent_size].T, 0, hp), 1, lp)
    wsig = _pad_axis(_pad_axis(w2[latent_size:].T, 0, hp), 1, lp)
    p["lin2_w"] = jnp.concatenate([wmu, wsig], axis=1).astype(jnp.bfloat16)
    bmu = _pad_axis(params["lin2_b"][:latent_size], 0, lp)
    bsig = _pad_axis(params["lin2_b"][latent_size:], 0, lp)
    p["lin2_b"] = jnp.concatenate([bmu, bsig], axis=0)[None, :]

    meta = {"cnn_cout": cout0, "latent": latent_size, "lp": lp}
    return p, meta


def encoder_forward(p, meta, x_nchw, noise):
    bsz, c0, h, w = x_nchw.shape
    lat = meta["latent"]
    lp = meta["lp"]

    # 1x1 conv: NCHW -> NHWC pixel matrix, row-tiled matmul kernel (true Cout,
    # bf16 output -> no wrapper slice).
    x = jnp.transpose(x_nchw, (0, 2, 3, 1)).reshape(bsz * h * w, c0)
    x = x.astype(jnp.bfloat16)
    y0 = conv1x1(x, p["cnn_w"], p["cnn_b"])
    x = y0.reshape(bsz, h, w, meta["cnn_cout"])

    # downsampling blocks: conv3x3/s2/p1 + BatchNorm(train) + ReLU via the
    # two-pass gridded kernels (tiled matmul + global stats, then in-place
    # BN apply + ReLU).  Channel dims stay unpadded end-to-end.
    for blk in p["blocks"]:
        patches, (b_, ho, wo) = _im2col_3x3_s2(x)
        out = conv_bn_relu(patches, blk["w"], blk["gamma"], blk["beta"])
        x = out.reshape(b_, ho, wo, blk["w"].shape[1])

    # NHWC flatten (lin1_w rows were permuted to match), pad feat to the
    # lane-tiled width expected by the head.
    feat = x.reshape(bsz, -1)
    feat = _pad_axis(feat, 1, p["lin1_w"].shape[0]).astype(jnp.bfloat16)

    noise_p = _pad_axis(noise, 1, lp)
    z, mu, sigma = mlp_head(feat, p["lin1_w"], p["lin1_b"],
                            p["lin2_w"], p["lin2_b"], noise_p)
    return z[:, :lat], (mu[:, :lat], sigma[:, :lat])


# ----------------------------------- main -------------------------------------

if __name__ == "__main__":
    # Small config consistent with the module's constructor arithmetic.
    IMG, LATENT, START_C, DOWNS, HIDDEN, DOWN_C = 16, 8, 3, 2, 32, 4
    BATCH = 2

    key = jax.random.PRNGKey(0)
    k_param, k_x, k_noise = jax.random.split(key, 3)

    raw = init_params(k_param, IMG, LATENT, START_C, DOWNS, HIDDEN, DOWN_C)
    prepped, meta = prepare_params(raw, IMG, LATENT, DOWNS)

    x = jax.random.normal(k_x, (BATCH, START_C, IMG, IMG), jnp.float32)
    # torch.randn_like noise is sampled host-side and fed in; the head kernel
    # fuses z = mu + noise * sigma.
    noise = jax.random.normal(k_noise, (BATCH, LATENT), jnp.float32)

    fwd = jax.jit(lambda pr, xx, nz: encoder_forward(pr, meta, xx, nz))
    z, (mu, sigma) = fwd(prepped, x, noise)
    jax.block_until_ready((z, mu, sigma))

    assert z.shape == (BATCH, LATENT)
    assert mu.shape == (BATCH, LATENT)
    assert sigma.shape == (BATCH, LATENT)
    assert bool(jnp.all(sigma > 0.0))
    assert bool(jnp.all(jnp.isfinite(z)))
    print("KERNEL_OK")
</pallas_src>

<mosaic_0001>
module attributes {stable_mosaic.version = 11 : i64} {
  func.func @_matmul_bias_kernel(%arg0: i32, %arg1: memref<512x3xbf16, #tpu.memory_space<vmem>>, %arg2: memref<3x4xbf16, #tpu.memory_space<vmem>>, %arg3: memref<1x4xf32, #tpu.memory_space<vmem>>, %arg4: memref<512x4xbf16, #tpu.memory_space<vmem>>) attributes {dimension_semantics = [#tpu.dimension_semantics<parallel>], iteration_bounds = array<i64: 1>, scalar_prefetch = 0 : i64, scratch_operands = 0 : i64, tpu.core_type = #tpu.core_type<tc>, window_params = [{transform_indices = @transform_0, window_bounds = array<i64: 512, 3>}, {pipeline_mode = #tpu.pipeline_mode<synchronous>, transform_indices = @transform_1, window_bounds = array<i64: 3, 4>}, {pipeline_mode = #tpu.pipeline_mode<synchronous>, transform_indices = @transform_2, window_bounds = array<i64: 1, 4>}, {transform_indices = @transform_3, window_bounds = array<i64: 512, 4>}]} {
    %c0 = arith.constant 0 : index
    %c0_0 = arith.constant 0 : index
    %0 = vector.load %arg1[%c0, %c0_0] : memref<512x3xbf16, #tpu.memory_space<vmem>>, vector<512x3xbf16>
    %c0_1 = arith.constant 0 : index
    %c0_2 = arith.constant 0 : index
    %1 = vector.load %arg2[%c0_1, %c0_2] : memref<3x4xbf16, #tpu.memory_space<vmem>>, vector<3x4xbf16>
    %cst = arith.constant dense<0.000000e+00> : vector<512x4xf32>
    %2 = tpu.matmul %0, %1, %cst {dimension_numbers = #tpu.dot_dimension_numbers<[1], [0], [0], [1], [0, 0, 1, 1], [], []>} : vector<512x3xbf16>, vector<3x4xbf16>, vector<512x4xf32> -> vector<512x4xf32>
    %c0_3 = arith.constant 0 : index
    %c0_4 = arith.constant 0 : index
    %3 = vector.load %arg3[%c0_3, %c0_4] : memref<1x4xf32, #tpu.memory_space<vmem>>, vector<1x4xf32>
    %4 = vector.broadcast %3 : vector<1x4xf32> to vector<512x4xf32>
    %5 = arith.addf %2, %4 : vector<512x4xf32>
    %6 = arith.truncf %5 : vector<512x4xf32> to vector<512x4xbf16>
    %c0_5 = arith.constant 0 : index
    %c0_6 = arith.constant 0 : index
    %7 = vector.load %arg4[%c0_5, %c0_6] : memref<512x4xbf16, #tpu.memory_space<vmem>>, vector<512x4xbf16>
    tpu.vector_store %arg4[%c0_5, %c0_6], %6 {strides = array<i32>} : memref<512x4xbf16, #tpu.memory_space<vmem>>, vector<512x4xbf16>,
    return
  }
  func.func @transform_0(%arg0: i32) -> (i32, i32) {
    %c0_i32 = arith.constant 0 : i32
    %c0_i32_0 = arith.constant 0 : i32
    return %arg0, %c0_i32 : i32, i32
  }
  func.func @transform_1(%arg0: i32) -> (i32, i32) {
    %c0_i32 = arith.constant 0 : i32
    %c0_i32_0 = arith.constant 0 : i32
    %c0_i32_1 = arith.constant 0 : i32
    return %c0_i32, %c0_i32_0 : i32, i32
  }
  func.func @transform_2(%arg0: i32) -> (i32, i32) {
    %c0_i32 = arith.constant 0 : i32
    %c0_i32_0 = arith.constant 0 : i32
    %c0_i32_1 = arith.constant 0 : i32
    return %c0_i32, %c0_i32_0 : i32, i32
  }
  func.func @transform_3(%arg0: i32) -> (i32, i32) {
    %c0_i32 = arith.constant 0 : i32
    %c0_i32_0 = arith.constant 0 : i32
    return %arg0, %c0_i32 : i32, i32
  }
}

module attributes {stable_mosaic.version = 11 : i64} {
  func.func @_conv_stats_kernel(%arg0: i32, %arg1: i32, %arg2: memref<128x36xbf16, #tpu.memory_space<vmem>>, %arg3: memref<36x8xbf16, #tpu.memory_space<vmem>>, %arg4: memref<128x8xbf16, #tpu.memory_space<vmem>>, %arg5: memref<8x8xf32, #tpu.memory_space<vmem>>, %arg6: memref<8x8xf32, #tpu.memory_space<vmem>>) attributes {dimension_semantics = [#tpu.dimension_semantics<parallel>, #tpu.dimension_semantics<arbitrary>], iteration_bounds = array<i64: 1, 1>, scalar_prefetch = 0 : i64, scratch_operands = 0 : i64, tpu.core_type = #tpu.core_type<tc>, window_params = [{transform_indices = @transform_0, window_bounds = array<i64: 128, 36>}, {pipeline_mode = #tpu.pipeline_mode<synchronous>, transform_indices = @transform_1, window_bounds = array<i64: 36, 8>}, {transform_indices = @transform_2, window_bounds = array<i64: 128, 8>}, {transform_indices = @transform_3, window_bounds = array<i64: 8, 8>}, {transform_indices = @transform_4, window_bounds = array<i64: 8, 8>}]} {
    %c0 = arith.constant 0 : index
    %c0_0 = arith.constant 0 : index
    %0 = vector.load %arg2[%c0, %c0_0] : memref<128x36xbf16, #tpu.memory_space<vmem>>, vector<128x36xbf16>
    %c0_1 = arith.constant 0 : index
    %c0_2 = arith.constant 0 : index
    %1 = vector.load %arg3[%c0_1, %c0_2] : memref<36x8xbf16, #tpu.memory_space<vmem>>, vector<36x8xbf16>
    %cst = arith.constant dense<0.000000e+00> : vector<128x8xf32>
    %2 = tpu.matmul %0, %1, %cst {dimension_numbers = #tpu.dot_dimension_numbers<[1], [0], [0], [1], [0, 0, 1, 1], [], []>} : vector<128x36xbf16>, vector<36x8xbf16>, vector<128x8xf32> -> vector<128x8xf32>
    %3 = arith.truncf %2 : vector<128x8xf32> to vector<128x8xbf16>
    %c0_3 = arith.constant 0 : index
    %c0_4 = arith.constant 0 : index
    %4 = vector.load %arg4[%c0_3, %c0_4] : memref<128x8xbf16, #tpu.memory_space<vmem>>, vector<128x8xbf16>
    tpu.vector_store %arg4[%c0_3, %c0_4], %3 {strides = array<i32>} : memref<128x8xbf16, #tpu.memory_space<vmem>>, vector<128x8xbf16>,
    %c0_i32 = arith.constant 0 : i32
    %5 = arith.cmpi eq, %arg1, %c0_i32 : i32
    %6 = arith.extui %5 : i1 to i32
    %c0_i32_5 = arith.constant 0 : i32
    %7 = arith.cmpi ne, %6, %c0_i32_5 : i32
    scf.if %7 {
      %cst_16 = arith.constant 0.000000e+00 : f32
      %19 = vector.broadcast %cst_16 : f32 to vector<8x8xf32>
      %c0_17 = arith.constant 0 : index
      %c0_18 = arith.constant 0 : index
      %20 = vector.load %arg5[%c0_17, %c0_18] : memref<8x8xf32, #tpu.memory_space<vmem>>, vector<8x8xf32>
      tpu.vector_store %arg5[%c0_17, %c0_18], %19 {strides = array<i32>} : memref<8x8xf32, #tpu.memory_space<vmem>>, vector<8x8xf32>,
      %cst_19 = arith.constant 0.000000e+00 : f32
      %21 = vector.broadcast %cst_19 : f32 to vector<8x8xf32>
      %c0_20 = arith.constant 0 : index
      %c0_21 = arith.constant 0 : index
      %22 = vector.load %arg6[%c0_20, %c0_21] : memref<8x8xf32, #tpu.memory_space<vmem>>, vector<8x8xf32>
      tpu.vector_store %arg6[%c0_20, %c0_21], %21 {strides = array<i32>} : memref<8x8xf32, #tpu.memory_space<vmem>>, vector<8x8xf32>,
    } else {
    }
    %cst_6 = arith.constant dense<0.000000e+00> : vector<8xf32>
    %8 = vector.multi_reduction <add>, %2, %cst_6 [0] : vector<128x8xf32> to vector<8xf32>
    %9 = vector.shape_cast %8 : vector<8xf32> to vector<1x8xf32>
    %10 = arith.mulf %2, %2 : vector<128x8xf32>
    %cst_7 = arith.constant dense<0.000000e+00> : vector<8xf32>
    %11 = vector.multi_reduction <add>, %10, %cst_7 [0] : vector<128x8xf32> to vector<8xf32>
    %12 = vector.shape_cast %11 : vector<8xf32> to vector<1x8xf32>
    %c0_8 = arith.constant 0 : index
    %c0_9 = arith.constant 0 : index
    %13 = vector.load %arg5[%c0_8, %c0_9] : memref<8x8xf32, #tpu.memory_space<vmem>>, vector<1x8xf32>
    %14 = arith.addf %13, %9 : vector<1x8xf32>
    %c0_10 = arith.constant 0 : index
    %c0_11 = arith.constant 0 : index
    %15 = vector.load %arg5[%c0_10, %c0_11] : memref<8x8xf32, #tpu.memory_space<vmem>>, vector<1x8xf32>
    tpu.vector_store %arg5[%c0_10, %c0_11], %14 {strides = array<i32>} : memref<8x8xf32, #tpu.memory_space<vmem>>, vector<1x8xf32>,
    %c0_12 = arith.constant 0 : index
    %c0_13 = arith.constant 0 : index
    %16 = vector.load %arg6[%c0_12, %c0_13] : memref<8x8xf32, #tpu.memory_space<vmem>>, vector<1x8xf32>
    %17 = arith.addf %16, %12 : vector<1x8xf32>
    %c0_14 = arith.constant 0 : index
    %c0_15 = arith.constant 0 : index
    %18 = vector.load %arg6[%c0_14, %c0_15] : memref<8x8xf32, #tpu.memory_space<vmem>>, vector<1x8xf32>
    tpu.vector_store %arg6[%c0_14, %c0_15], %17 {strides = array<i32>} : memref<8x8xf32, #tpu.memory_space<vmem>>, vector<1x8xf32>,
    return
  }
  func.func @transform_0(%arg0: i32, %arg1: i32) -> (i32, i32) {
    %c1_i32 = arith.constant 1 : i32
    %0 = arith.muli %arg0, %c1_i32 : i32
    %1 = arith.addi %0, %arg1 : i32
    %c0_i32 = arith.constant 0 : i32
    %c0_i32_0 = arith.constant 0 : i32
    return %1, %c0_i32 : i32, i32
  }
  func.func @transform_1(%arg0: i32, %arg1: i32) -> (i32, i32) {
    %c0_i32 = arith.constant 0 : i32
    %c0_i32_0 = arith.constant 0 : i32
    %c0_i32_1 = arith.constant 0 : i32
    return %c0_i32, %c0_i32_0 : i32, i32
  }
  func.func @transform_2(%arg0: i32, %arg1: i32) -> (i32, i32) {
    %c1_i32 = arith.constant 1 : i32
    %0 = arith.muli %arg0, %c1_i32 : i32
    %1 = arith.addi %0, %arg1 : i32
    %c0_i32 = arith.constant 0 : i32
    %c0_i32_0 = arith.constant 0 : i32
    return %1, %c0_i32 : i32, i32
  }
  func.func @transform_3(%arg0: i32, %arg1: i32) -> (i32, i32) {
    %c0_i32 = arith.constant 0 : i32
    %c0_i32_0 = arith.constant 0 : i32
    return %arg0, %c0_i32 : i32, i32
  }
  func.func @transform_4(%arg0: i32, %arg1: i32) -> (i32, i32) {
    %c0_i32 = arith.constant 0 : i32
    %c0_i32_0 = arith.constant 0 : i32
    return %arg0, %c0_i32 : i32, i32
  }
}

module attributes {stable_mosaic.version = 11 : i64} {
  func.func @_bn_relu_kernel(%arg0: i32, %arg1: memref<128x8xbf16, #tpu.memory_space<vmem>>, %arg2: memref<1x8xf32, #tpu.memory_space<vmem>>, %arg3: memref<1x8xf32, #tpu.memory_space<vmem>>, %arg4: memref<128x8xbf16, #tpu.memory_space<vmem>>) attributes {dimension_semantics = [#tpu.dimension_semantics<parallel>], iteration_bounds = array<i64: 1>, scalar_prefetch = 0 : i64, scratch_operands = 0 : i64, tpu.core_type = #tpu.core_type<tc>, window_params = [{transform_indices = @transform_0, window_bounds = array<i64: 128, 8>}, {pipeline_mode = #tpu.pipeline_mode<synchronous>, transform_indices = @transform_1, window_bounds = array<i64: 1, 8>}, {pipeline_mode = #tpu.pipeline_mode<synchronous>, transform_indices = @transform_2, window_bounds = array<i64: 1, 8>}, {transform_indices = @transform_3, window_bounds = array<i64: 128, 8>}]} {
    %c0 = arith.constant 0 : index
    %c0_0 = arith.constant 0 : index
    %0 = vector.load %arg1[%c0, %c0_0] : memref<128x8xbf16, #tpu.memory_space<vmem>>, vector<128x8xbf16>
    %c0_1 = arith.constant 0 : index
    %c0_2 = arith.constant 0 : index
    %1 = vector.load %arg2[%c0_1, %c0_2] : memref<1x8xf32, #tpu.memory_space<vmem>>, vector<1x8xf32>
    %2 = arith.extf %0 : vector<128x8xbf16> to vector<128x8xf32>
    %3 = vector.broadcast %1 : vector<1x8xf32> to vector<128x8xf32>
    %4 = arith.mulf %2, %3 : vector<128x8xf32>
    %c0_3 = arith.constant 0 : index
    %c0_4 = arith.constant 0 : index
    %5 = vector.load %arg3[%c0_3, %c0_4] : memref<1x8xf32, #tpu.memory_space<vmem>>, vector<1x8xf32>
    %6 = vector.broadcast %5 : vector<1x8xf32> to vector<128x8xf32>
    %7 = arith.addf %4, %6 : vector<128x8xf32>
    %cst = arith.constant 0.000000e+00 : f32
    %8 = vector.broadcast %cst : f32 to vector<128x8xf32>
    %9 = arith.maximumf %7, %8 : vector<128x8xf32>
    %10 = arith.truncf %9 : vector<128x8xf32> to vector<128x8xbf16>
    %c0_5 = arith.constant 0 : index
    %c0_6 = arith.constant 0 : index
    %11 = vector.load %arg4[%c0_5, %c0_6] : memref<128x8xbf16, #tpu.memory_space<vmem>>, vector<128x8xbf16>
    tpu.vector_store %arg4[%c0_5, %c0_6], %10 {strides = array<i32>} : memref<128x8xbf16, #tpu.memory_space<vmem>>, vector<128x8xbf16>,
    return
  }
  func.func @transform_0(%arg0: i32) -> (i32, i32) {
    %c0_i32 = arith.constant 0 : i32
    %c0_i32_0 = arith.constant 0 : i32
    return %arg0, %c0_i32 : i32, i32
  }
  func.func @transform_1(%arg0: i32) -> (i32, i32) {
    %c0_i32 = arith.constant 0 : i32
    %c0_i32_0 = arith.constant 0 : i32
    %c0_i32_1 = arith.constant 0 : i32
    return %c0_i32, %c0_i32_0 : i32, i32
  }
  func.func @transform_2(%arg0: i32) -> (i32, i32) {
    %c0_i32 = arith.constant 0 : i32
    %c0_i32_0 = arith.constant 0 : i32
    %c0_i32_1 = arith.constant 0 : i32
    return %c0_i32, %c0_i32_0 : i32, i32
  }
  func.func @transform_3(%arg0: i32) -> (i32, i32) {
    %c0_i32 = arith.constant 0 : i32
    %c0_i32_0 = arith.constant 0 : i32
    return %arg0, %c0_i32 : i32, i32
  }
}

module attributes {stable_mosaic.version = 11 : i64} {
  func.func @_conv_stats_kernel(%arg0: i32, %arg1: i32, %arg2: memref<32x72xbf16, #tpu.memory_space<vmem>>, %arg3: memref<72x16xbf16, #tpu.memory_space<vmem>>, %arg4: memref<32x16xbf16, #tpu.memory_space<vmem>>, %arg5: memref<8x16xf32, #tpu.memory_space<vmem>>, %arg6: memref<8x16xf32, #tpu.memory_space<vmem>>) attributes {dimension_semantics = [#tpu.dimension_semantics<parallel>, #tpu.dimension_semantics<arbitrary>], iteration_bounds = array<i64: 1, 1>, scalar_prefetch = 0 : i64, scratch_operands = 0 : i64, tpu.core_type = #tpu.core_type<tc>, window_params = [{transform_indices = @transform_0, window_bounds = array<i64: 32, 72>}, {pipeline_mode = #tpu.pipeline_mode<synchronous>, transform_indices = @transform_1, window_bounds = array<i64: 72, 16>}, {transform_indices = @transform_2, window_bounds = array<i64: 32, 16>}, {transform_indices = @transform_3, window_bounds = array<i64: 8, 16>}, {transform_indices = @transform_4, window_bounds = array<i64: 8, 16>}]} {
    %c0 = arith.constant 0 : index
    %c0_0 = arith.constant 0 : index
    %0 = vector.load %arg2[%c0, %c0_0] : memref<32x72xbf16, #tpu.memory_space<vmem>>, vector<32x72xbf16>
    %c0_1 = arith.constant 0 : index
    %c0_2 = arith.constant 0 : index
    %1 = vector.load %arg3[%c0_1, %c0_2] : memref<72x16xbf16, #tpu.memory_space<vmem>>, vector<72x16xbf16>
    %cst = arith.constant dense<0.000000e+00> : vector<32x16xf32>
    %2 = tpu.matmul %0, %1, %cst {dimension_numbers = #tpu.dot_dimension_numbers<[1], [0], [0], [1], [0, 0, 1, 1], [], []>} : vector<32x72xbf16>, vector<72x16xbf16>, vector<32x16xf32> -> vector<32x16xf32>
    %3 = arith.truncf %2 : vector<32x16xf32> to vector<32x16xbf16>
    %c0_3 = arith.constant 0 : index
    %c0_4 = arith.constant 0 : index
    %4 = vector.load %arg4[%c0_3, %c0_4] : memref<32x16xbf16, #tpu.memory_space<vmem>>, vector<32x16xbf16>
    tpu.vector_store %arg4[%c0_3, %c0_4], %3 {strides = array<i32>} : memref<32x16xbf16, #tpu.memory_space<vmem>>, vector<32x16xbf16>,
    %c0_i32 = arith.constant 0 : i32
    %5 = arith.cmpi eq, %arg1, %c0_i32 : i32
    %6 = arith.extui %5 : i1 to i32
    %c0_i32_5 = arith.constant 0 : i32
    %7 = arith.cmpi ne, %6, %c0_i32_5 : i32
    scf.if %7 {
      %cst_16 = arith.constant 0.000000e+00 : f32
      %19 = vector.broadcast %cst_16 : f32 to vector<8x16xf32>
      %c0_17 = arith.constant 0 : index
      %c0_18 = arith.constant 0 : index
      %20 = vector.load %arg5[%c0_17, %c0_18] : memref<8x16xf32, #tpu.memory_space<vmem>>, vector<8x16xf32>
      tpu.vector_store %arg5[%c0_17, %c0_18], %19 {strides = array<i32>} : memref<8x16xf32, #tpu.memory_space<vmem>>, vector<8x16xf32>,
      %cst_19 = arith.constant 0.000000e+00 : f32
      %21 = vector.broadcast %cst_19 : f32 to vector<8x16xf32>
      %c0_20 = arith.constant 0 : index
      %c0_21 = arith.constant 0 : index
      %22 = vector.load %arg6[%c0_20, %c0_21] : memref<8x16xf32, #tpu.memory_space<vmem>>, vector<8x16xf32>
      tpu.vector_store %arg6[%c0_20, %c0_21], %21 {strides = array<i32>} : memref<8x16xf32, #tpu.memory_space<vmem>>, vector<8x16xf32>,
    } else {
    }
    %cst_6 = arith.constant dense<0.000000e+00> : vector<16xf32>
    %8 = vector.multi_reduction <add>, %2, %cst_6 [0] : vector<32x16xf32> to vector<16xf32>
    %9 = vector.shape_cast %8 : vector<16xf32> to vector<1x16xf32>
    %10 = arith.mulf %2, %2 : vector<32x16xf32>
    %cst_7 = arith.constant dense<0.000000e+00> : vector<16xf32>
    %11 = vector.multi_reduction <add>, %10, %cst_7 [0] : vector<32x16xf32> to vector<16xf32>
    %12 = vector.shape_cast %11 : vector<16xf32> to vector<1x16xf32>
    %c0_8 = arith.constant 0 : index
    %c0_9 = arith.constant 0 : index
    %13 = vector.load %arg5[%c0_8, %c0_9] : memref<8x16xf32, #tpu.memory_space<vmem>>, vector<1x16xf32>
    %14 = arith.addf %13, %9 : vector<1x16xf32>
    %c0_10 = arith.constant 0 : index
    %c0_11 = arith.constant 0 : index
    %15 = vector.load %arg5[%c0_10, %c0_11] : memref<8x16xf32, #tpu.memory_space<vmem>>, vector<1x16xf32>
    tpu.vector_store %arg5[%c0_10, %c0_11], %14 {strides = array<i32>} : memref<8x16xf32, #tpu.memory_space<vmem>>, vector<1x16xf32>,
    %c0_12 = arith.constant 0 : index
    %c0_13 = arith.constant 0 : index
    %16 = vector.load %arg6[%c0_12, %c0_13] : memref<8x16xf32, #tpu.memory_space<vmem>>, vector<1x16xf32>
    %17 = arith.addf %16, %12 : vector<1x16xf32>
    %c0_14 = arith.constant 0 : index
    %c0_15 = arith.constant 0 : index
    %18 = vector.load %arg6[%c0_14, %c0_15] : memref<8x16xf32, #tpu.memory_space<vmem>>, vector<1x16xf32>
    tpu.vector_store %arg6[%c0_14, %c0_15], %17 {strides = array<i32>} : memref<8x16xf32, #tpu.memory_space<vmem>>, vector<1x16xf32>,
    return
  }
  func.func @transform_0(%arg0: i32, %arg1: i32) -> (i32, i32) {
    %c1_i32 = arith.constant 1 : i32
    %0 = arith.muli %arg0, %c1_i32 : i32
    %1 = arith.addi %0, %arg1 : i32
    %c0_i32 = arith.constant 0 : i32
    %c0_i32_0 = arith.constant 0 : i32
    return %1, %c0_i32 : i32, i32
  }
  func.func @transform_1(%arg0: i32, %arg1: i32) -> (i32, i32) {
    %c0_i32 = arith.constant 0 : i32
    %c0_i32_0 = arith.constant 0 : i32
    %c0_i32_1 = arith.constant 0 : i32
    return %c0_i32, %c0_i32_0 : i32, i32
  }
  func.func @transform_2(%arg0: i32, %arg1: i32) -> (i32, i32) {
    %c1_i32 = arith.constant 1 : i32
    %0 = arith.muli %arg0, %c1_i32 : i32
    %1 = arith.addi %0, %arg1 : i32
    %c0_i32 = arith.constant 0 : i32
    %c0_i32_0 = arith.constant 0 : i32
    return %1, %c0_i32 : i32, i32
  }
  func.func @transform_3(%arg0: i32, %arg1: i32) -> (i32, i32) {
    %c0_i32 = arith.constant 0 : i32
    %c0_i32_0 = arith.constant 0 : i32
    return %arg0, %c0_i32 : i32, i32
  }
  func.func @transform_4(%arg0: i32, %arg1: i32) -> (i32, i32) {
    %c0_i32 = arith.constant 0 : i32
    %c0_i32_0 = arith.constant 0 : i32
    return %arg0, %c0_i32 : i32, i32
  }
}

module attributes {stable_mosaic.version = 11 : i64} {
  func.func @_bn_relu_kernel(%arg0: i32, %arg1: memref<32x16xbf16, #tpu.memory_space<vmem>>, %arg2: memref<1x16xf32, #tpu.memory_space<vmem>>, %arg3: memref<1x16xf32, #tpu.memory_space<vmem>>, %arg4: memref<32x16xbf16, #tpu.memory_space<vmem>>) attributes {dimension_semantics = [#tpu.dimension_semantics<parallel>], iteration_bounds = array<i64: 1>, scalar_prefetch = 0 : i64, scratch_operands = 0 : i64, tpu.core_type = #tpu.core_type<tc>, window_params = [{transform_indices = @transform_0, window_bounds = array<i64: 32, 16>}, {pipeline_mode = #tpu.pipeline_mode<synchronous>, transform_indices = @transform_1, window_bounds = array<i64: 1, 16>}, {pipeline_mode = #tpu.pipeline_mode<synchronous>, transform_indices = @transform_2, window_bounds = array<i64: 1, 16>}, {transform_indices = @transform_3, window_bounds = array<i64: 32, 16>}]} {
    %c0 = arith.constant 0 : index
    %c0_0 = arith.constant 0 : index
    %0 = vector.load %arg1[%c0, %c0_0] : memref<32x16xbf16, #tpu.memory_space<vmem>>, vector<32x16xbf16>
    %c0_1 = arith.constant 0 : index
    %c0_2 = arith.constant 0 : index
    %1 = vector.load %arg2[%c0_1, %c0_2] : memref<1x16xf32, #tpu.memory_space<vmem>>, vector<1x16xf32>
    %2 = arith.extf %0 : vector<32x16xbf16> to vector<32x16xf32>
    %3 = vector.broadcast %1 : vector<1x16xf32> to vector<32x16xf32>
    %4 = arith.mulf %2, %3 : vector<32x16xf32>
    %c0_3 = arith.constant 0 : index
    %c0_4 = arith.constant 0 : index
    %5 = vector.load %arg3[%c0_3, %c0_4] : memref<1x16xf32, #tpu.memory_space<vmem>>, vector<1x16xf32>
    %6 = vector.broadcast %5 : vector<1x16xf32> to vector<32x16xf32>
    %7 = arith.addf %4, %6 : vector<32x16xf32>
    %cst = arith.constant 0.000000e+00 : f32
    %8 = vector.broadcast %cst : f32 to vector<32x16xf32>
    %9 = arith.maximumf %7, %8 : vector<32x16xf32>
    %10 = arith.truncf %9 : vector<32x16xf32> to vector<32x16xbf16>
    %c0_5 = arith.constant 0 : index
    %c0_6 = arith.constant 0 : index
    %11 = vector.load %arg4[%c0_5, %c0_6] : memref<32x16xbf16, #tpu.memory_space<vmem>>, vector<32x16xbf16>
    tpu.vector_store %arg4[%c0_5, %c0_6], %10 {strides = array<i32>} : memref<32x16xbf16, #tpu.memory_space<vmem>>, vector<32x16xbf16>,
    return
  }
  func.func @transform_0(%arg0: i32) -> (i32, i32) {
    %c0_i32 = arith.constant 0 : i32
    %c0_i32_0 = arith.constant 0 : i32
    return %arg0, %c0_i32 : i32, i32
  }
  func.func @transform_1(%arg0: i32) -> (i32, i32) {
    %c0_i32 = arith.constant 0 : i32
    %c0_i32_0 = arith.constant 0 : i32
    %c0_i32_1 = arith.constant 0 : i32
    return %c0_i32, %c0_i32_0 : i32, i32
  }
  func.func @transform_2(%arg0: i32) -> (i32, i32) {
    %c0_i32 = arith.constant 0 : i32
    %c0_i32_0 = arith.constant 0 : i32
    %c0_i32_1 = arith.constant 0 : i32
    return %c0_i32, %c0_i32_0 : i32, i32
  }
  func.func @transform_3(%arg0: i32) -> (i32, i32) {
    %c0_i32 = arith.constant 0 : i32
    %c0_i32_0 = arith.constant 0 : i32
    return %arg0, %c0_i32 : i32, i32
  }
}

module attributes {stable_mosaic.version = 11 : i64} {
  func.func @_mlp_head_kernel(%arg0: i32, %arg1: memref<2x256xbf16, #tpu.memory_space<vmem>>, %arg2: memref<256x128xbf16, #tpu.memory_space<vmem>>, %arg3: memref<1x128xf32, #tpu.memory_space<vmem>>, %arg4: memref<128x256xbf16, #tpu.memory_space<vmem>>, %arg5: memref<1x256xf32, #tpu.memory_space<vmem>>, %arg6: memref<2x128xf32, #tpu.memory_space<vmem>>, %arg7: memref<2x128xf32, #tpu.memory_space<vmem>>, %arg8: memref<2x128xf32, #tpu.memory_space<vmem>>, %arg9: memref<2x128xf32, #tpu.memory_space<vmem>>, %arg10: memref<2x128xf32, #tpu.memory_space<vmem>>) attributes {dimension_semantics = [#tpu.dimension_semantics<arbitrary>], iteration_bounds = array<i64: 1>, scalar_prefetch = 0 : i64, scratch_operands = 1 : i64, tpu.core_type = #tpu.core_type<tc>, window_params = [{transform_indices = @transform_0, window_bounds = array<i64: 2, 256>}, {transform_indices = @transform_1, window_bounds = array<i64: 256, 128>}, {pipeline_mode = #tpu.pipeline_mode<synchronous>, transform_indices = @transform_2, window_bounds = array<i64: 1, 128>}, {pipeline_mode = #tpu.pipeline_mode<synchronous>, transform_indices = @transform_3, window_bounds = array<i64: 128, 256>}, {pipeline_mode = #tpu.pipeline_mode<synchronous>, transform_indices = @transform_4, window_bounds = array<i64: 1, 256>}, {pipeline_mode = #tpu.pipeline_mode<synchronous>, transform_indices = @transform_5, window_bounds = array<i64: 2, 128>}, {pipeline_mode = #tpu.pipeline_mode<synchronous>, transform_indices = @transform_6, window_bounds = array<i64: 2, 128>}, {pipeline_mode = #tpu.pipeline_mode<synchronous>, transform_indices = @transform_7, window_bounds = array<i64: 2, 128>}, {pipeline_mode = #tpu.pipeline_mode<synchronous>, transform_indices = @transform_8, window_bounds = array<i64: 2, 128>}]} {
    %c0_i32 = arith.constant 0 : i32
    %0 = arith.cmpi eq, %arg0, %c0_i32 : i32
    %1 = arith.extui %0 : i1 to i32
    %c0_i32_0 = arith.constant 0 : i32
    %2 = arith.cmpi ne, %1, %c0_i32_0 : i32
    scf.if %2 {
      %cst_10 = arith.constant 0.000000e+00 : f32
      %12 = vector.broadcast %cst_10 : f32 to vector<2x128xf32>
      %c0_11 = arith.constant 0 : index
      %c0_12 = arith.constant 0 : index
      %13 = vector.load %arg10[%c0_11, %c0_12] : memref<2x128xf32, #tpu.memory_space<vmem>>, vector<2x128xf32>
      tpu.vector_store %arg10[%c0_11, %c0_12], %12 {strides = array<i32>} : memref<2x128xf32, #tpu.memory_space<vmem>>, vector<2x128xf32>,
    } else {
    }
    %c0 = arith.constant 0 : index
    %c0_1 = arith.constant 0 : index
    %3 = vector.load %arg10[%c0, %c0_1] : memref<2x128xf32, #tpu.memory_space<vmem>>, vector<2x128xf32>
    %c0_2 = arith.constant 0 : index
    %c0_3 = arith.constant 0 : index
    %4 = vector.load %arg1[%c0_2, %c0_3] : memref<2x256xbf16, #tpu.memory_space<vmem>>, vector<2x256xbf16>
    %c0_4 = arith.constant 0 : index
    %c0_5 = arith.constant 0 : index
    %5 = vector.load %arg2[%c0_4, %c0_5] : memref<256x128xbf16, #tpu.memory_space<vmem>>, vector<256x128xbf16>
    %cst = arith.constant dense<0.000000e+00> : vector<2x128xf32>
    %6 = tpu.matmul %4, %5, %cst {dimension_numbers = #tpu.dot_dimension_numbers<[1], [0], [0], [1], [0, 0, 1, 1], [], []>} : vector<2x256xbf16>, vector<256x128xbf16>, vector<2x128xf32> -> vector<2x128xf32>
    %7 = arith.addf %3, %6 : vector<2x128xf32>
    %c0_6 = arith.constant 0 : index
    %c0_7 = arith.constant 0 : index
    %8 = vector.load %arg10[%c0_6, %c0_7] : memref<2x128xf32, #tpu.memory_space<vmem>>, vector<2x128xf32>
    tpu.vector_store %arg10[%c0_6, %c0_7], %7 {strides = array<i32>} : memref<2x128xf32, #tpu.memory_space<vmem>>, vector<2x128xf32>,
    %c0_i32_8 = arith.constant 0 : i32
    %9 = arith.cmpi eq, %arg0, %c0_i32_8 : i32
    %10 = arith.extui %9 : i1 to i32
    %c0_i32_9 = arith.constant 0 : i32
    %11 = arith.cmpi ne, %10, %c0_i32_9 : i32
    scf.if %11 {
      %c0_10 = arith.constant 0 : index
      %c0_11 = arith.constant 0 : index
      %12 = vector.load %arg10[%c0_10, %c0_11] : memref<2x128xf32, #tpu.memory_space<vmem>>, vector<2x128xf32>
      %c0_12 = arith.constant 0 : index
      %c0_13 = arith.constant 0 : index
      %13 = vector.load %arg3[%c0_12, %c0_13] : memref<1x128xf32, #tpu.memory_space<vmem>>, vector<1x128xf32>
      %14 = vector.broadcast %13 : vector<1x128xf32> to vector<2x128xf32>
      %15 = arith.addf %12, %14 : vector<2x128xf32>
      %cst_14 = arith.constant 0.000000e+00 : f32
      %16 = vector.broadcast %cst_14 : f32 to vector<2x128xf32>
      %17 = arith.maximumf %15, %16 : vector<2x128xf32>
      %18 = arith.truncf %17 : vector<2x128xf32> to vector<2x128xbf16>
      %c0_15 = arith.constant 0 : index
      %c0_16 = arith.constant 0 : index
      %19 = vector.load %arg4[%c0_15, %c0_16] : memref<128x256xbf16, #tpu.memory_space<vmem>>, vector<128x256xbf16>
      %cst_17 = arith.constant dense<0.000000e+00> : vector<2x256xf32>
      %20 = tpu.matmul %18, %19, %cst_17 {dimension_numbers = #tpu.dot_dimension_numbers<[1], [0], [0], [1], [0, 0, 1, 1], [], []>} : vector<2x128xbf16>, vector<128x256xbf16>, vector<2x256xf32> -> vector<2x256xf32>
      %c0_18 = arith.constant 0 : index
      %c0_19 = arith.constant 0 : index
      %21 = vector.load %arg5[%c0_18, %c0_19] : memref<1x256xf32, #tpu.memory_space<vmem>>, vector<1x256xf32>
      %22 = vector.broadcast %21 : vector<1x256xf32> to vector<2x256xf32>
      %23 = arith.addf %20, %22 : vector<2x256xf32>
      %24 = vector.extract_strided_slice %23 {offsets = [0, 0], sizes = [2, 128], strides = [1, 1]} : vector<2x256xf32> to vector<2x128xf32>
      %25 = vector.extract_strided_slice %23 {offsets = [0, 128], sizes = [2, 128], strides = [1, 1]} : vector<2x256xf32> to vector<2x128xf32>
      %26 = math.exp %25 : vector<2x128xf32>
      %c0_20 = arith.constant 0 : index
      %c0_21 = arith.constant 0 : index
      %27 = vector.load %arg8[%c0_20, %c0_21] : memref<2x128xf32, #tpu.memory_space<vmem>>, vector<2x128xf32>
      tpu.vector_store %arg8[%c0_20, %c0_21], %24 {strides = array<i32>} : memref<2x128xf32, #tpu.memory_space<vmem>>, vector<2x128xf32>,
      %c0_22 = arith.constant 0 : index
      %c0_23 = arith.constant 0 : index
      %28 = vector.load %arg9[%c0_22, %c0_23] : memref<2x128xf32, #tpu.memory_space<vmem>>, vector<2x128xf32>
      tpu.vector_store %arg9[%c0_22, %c0_23], %26 {strides = array<i32>} : memref<2x128xf32, #tpu.memory_space<vmem>>, vector<2x128xf32>,
      %c0_24 = arith.constant 0 : index
      %c0_25 = arith.constant 0 : index
      %29 = vector.load %arg6[%c0_24, %c0_25] : memref<2x128xf32, #tpu.memory_space<vmem>>, vector<2x128xf32>
      %30 = arith.mulf %29, %26 : vector<2x128xf32>
      %31 = arith.addf %24, %30 : vector<2x128xf32>
      %c0_26 = arith.constant 0 : index
      %c0_27 = arith.constant 0 : index
      %32 = vector.load %arg7[%c0_26, %c0_27] : memref<2x128xf32, #tpu.memory_space<vmem>>, vector<2x128xf32>
      tpu.vector_store %arg7[%c0_26, %c0_27], %31 {strides = array<i32>} : memref<2x128xf32, #tpu.memory_space<vmem>>, vector<2x128xf32>,
    } else {
    }
    return
  }
  func.func @transform_0(%arg0: i32) -> (i32, i32) {
    %c0_i32 = arith.constant 0 : i32
    %c0_i32_0 = arith.constant 0 : i32
    return %c0_i32, %arg0 : i32, i32
  }
  func.func @transform_1(%arg0: i32) -> (i32, i32) {
    %c0_i32 = arith.constant 0 : i32
    %c0_i32_0 = arith.constant 0 : i32
    return %arg0, %c0_i32 : i32, i32
  }
  func.func @transform_2(%arg0: i32) -> (i32, i32) {
    %c0_i32 = arith.constant 0 : i32
    %c0_i32_0 = arith.constant 0 : i32
    %c0_i32_1 = arith.constant 0 : i32
    return %c0_i32, %c0_i32_0 : i32, i32
  }
  func.func @transform_3(%arg0: i32) -> (i32, i32) {
    %c0_i32 = arith.constant 0 : i32
    %c0_i32_0 = arith.constant 0 : i32
    %c0_i32_1 = arith.constant 0 : i32
    return %c0_i32, %c0_i32_0 : i32, i32
  }
  func.func @transform_4(%arg0: i32) -> (i32, i32) {
    %c0_i32 = arith.constant 0 : i32
    %c0_i32_0 = arith.constant 0 : i32
    %c0_i32_1 = arith.constant 0 : i32
    return %c0_i32, %c0_i32_0 : i32, i32
  }
  func.func @transform_5(%arg0: i32) -> (i32, i32) {
    %c0_i32 = arith.constant 0 : i32
    %c0_i32_0 = arith.constant 0 : i32
    %c0_i32_1 = arith.constant 0 : i32
    return %c0_i32, %c0_i32_0 : i32, i32
  }
  func.func @transform_6(%arg0: i32) -> (i32, i32) {
    %c0_i32 = arith.constant 0 : i32
    %c0_i32_0 = arith.constant 0 : i32
    %c0_i32_1 = arith.constant 0 : i32
    return %c0_i32, %c0_i32_0 : i32, i32
  }
  func.func @transform_7(%arg0: i32) -> (i32, i32) {
    %c0_i32 = arith.constant 0 : i32
    %c0_i32_0 = arith.constant 0 : i32
    %c0_i32_1 = arith.constant 0 : i32
    return %c0_i32, %c0_i32_0 : i32, i32
  }
  func.func @transform_8(%arg0: i32) -> (i32, i32) {
    %c0_i32 = arith.constant 0 : i32
    %c0_i32_0 = arith.constant 0 : i32
    %c0_i32_1 = arith.constant 0 : i32
    return %c0_i32, %c0_i32_0 : i32, i32
  }
}

</mosaic_0001>

<llo_original>
// kernel: _lambda_.6
$region0: #{_lambda_.6}
  #allocation0 [shape = 'u32[]', space=smem, size = 0x4, offset = 0x4, fixed_abs, tag = 'smem constant byte address 0x4 - core index']
  #allocation1 [shape = 'u32[72,128]{1,0:T(1,128)}', space=vmem, size = 0x9000, scoped, tag = 'internal scratch']
  %s0 = inlined_call_operand.vmem [shape: bf16[512,3], index: 0, kind: input, shape index: {}]
  %s1 = inlined_call_operand.vmem [shape: bf16[3,4], index: 1, kind: input, shape index: {}]
  %s2 = inlined_call_operand.vmem [shape: f32[1,4], index: 2, kind: input, shape index: {}]
  %s3 = inlined_call_operand.vmem [shape: bf16[512,4], index: 3, kind: output, shape index: {}]
  %s4 = sld [smem:[#allocation0]]
  $region22: #{_lambda_.6} parent=0
    _
  %s6 = ssub.s32 1, %s4
  %s7 = scalar_select 0, %s6, %s4
  // Predicated region
  $region2: #{_lambda_.6} parent=0 // pred_check
    _
  $region3: #{_lambda_.6} parent=0 // pred_check_branch
    %9 = sbr.rel (0) target = $region5
  $region4: #{_lambda_.6} parent=0 // pred_region
    _
  $region5: #{_lambda_.6} parent=0 // pred_fallthru
    _
  // Predicated region
  $region6: #{_lambda_.6} parent=0 // pred_check
    _
  $region7: #{_lambda_.6} parent=0 // pred_check_branch
    %11 = sbr.rel (0) target = $region9
  $region8: #{_lambda_.6} parent=0 // pred_region
    _
  $region9: #{_lambda_.6} parent=0 // pred_fallthru
    _
  // Predicated region
  $region10: #{_lambda_.6} parent=0 // pred_check
    _
  $region11: #{_lambda_.6} parent=0 // pred_check_branch
    %13 = sbr.rel (0) target = $region13
  $region12: #{_lambda_.6} parent=0 // pred_region
    _
  $region13: #{_lambda_.6} parent=0 // pred_fallthru
    _
  %v15 = vld [vmem:[%s0] sm:$0xf]
  %v16 = vld [vmem:[%s0 + $0x4] sm:$0xf]
  %v17 = vld [vmem:[%s0 + $0x8] sm:$0xf]
  %v18 = vld [vmem:[%s0 + $0xc] sm:$0xf]
  %v19 = vld [vmem:[%s0 + $0x10] sm:$0xf]
  %v20 = vld [vmem:[%s0 + $0x14] sm:$0xf]
  %v21 = vld [vmem:[%s0 + $0x18] sm:$0xf]
  %v22 = vld [vmem:[%s0 + $0x1c] sm:$0xf]
  %v23 = vld [vmem:[%s0 + $0x20] sm:$0xf]
  %v24 = vld [vmem:[%s0 + $0x24] sm:$0xf]
  %v25 = vld [vmem:[%s0 + $0x28] sm:$0xf]
  %v26 = vld [vmem:[%s0 + $0x2c] sm:$0xf]
  %v27 = vld [vmem:[%s0 + $0x30] sm:$0xf]
  %v28 = vld [vmem:[%s0 + $0x34] sm:$0xf]
  %v29 = vld [vmem:[%s0 + $0x38] sm:$0xf]
  %v30 = vld [vmem:[%s0 + $0x3c] sm:$0xf]
  %v31 = vld [vmem:[%s0 + $0x40] sm:$0xf]
  %v32 = vld [vmem:[%s0 + $0x44] sm:$0xf]
  %v33 = vld [vmem:[%s0 + $0x48] sm:$0xf]
  %v34 = vld [vmem:[%s0 + $0x4c] sm:$0xf]
  %v35 = vld [vmem:[%s0 + $0x50] sm:$0xf]
  %v36 = vld [vmem:[%s0 + $0x54] sm:$0xf]
  %v37 = vld [vmem:[%s0 + $0x58] sm:$0xf]
  %v38 = vld [vmem:[%s0 + $0x5c] sm:$0xf]
  %v39 = vld [vmem:[%s0 + $0x60] sm:$0xf]
  %v40 = vld [vmem:[%s0 + $0x64] sm:$0xf]
  %v41 = vld [vmem:[%s0 + $0x68] sm:$0xf]
  %v42 = vld [vmem:[%s0 + $0x6c] sm:$0xf]
  %v43 = vld [vmem:[%s0 + $0x70] sm:$0xf]
  %v44 = vld [vmem:[%s0 + $0x74] sm:$0xf]
  %v45 = vld [vmem:[%s0 + $0x78] sm:$0xf]
  %v46 = vld [vmem:[%s0 + $0x7c] sm:$0xf]
  %v47 = vld [vmem:[%s0 + $0x80] sm:$0xf]
  %v48 = vld [vmem:[%s0 + $0x84] sm:$0xf]
  %v49 = vld [vmem:[%s0 + $0x88] sm:$0xf]
  %v50 = vld [vmem:[%s0 + $0x8c] sm:$0xf]
  %v51 = vld [vmem:[%s0 + $0x90] sm:$0xf]
  %v52 = vld [vmem:[%s0 + $0x94] sm:$0xf]
  %v53 = vld [vmem:[%s0 + $0x98] sm:$0xf]
  %v54 = vld [vmem:[%s0 + $0x9c] sm:$0xf]
  %v55 = vld [vmem:[%s0 + $0xa0] sm:$0xf]
  %v56 = vld [vmem:[%s0 + $0xa4] sm:$0xf]
  %v57 = vld [vmem:[%s0 + $0xa8] sm:$0xf]
  %v58 = vld [vmem:[%s0 + $0xac] sm:$0xf]
  %v59 = vld [vmem:[%s0 + $0xb0] sm:$0xf]
  %v60 = vld [vmem:[%s0 + $0xb4] sm:$0xf]
  %v61 = vld [vmem:[%s0 + $0xb8] sm:$0xf]
  %v62 = vld [vmem:[%s0 + $0xbc] sm:$0xf]
  %v63 = vld [vmem:[%s0 + $0xc0] sm:$0xf]
  %v64 = vld [vmem:[%s0 + $0xc4] sm:$0xf]
  %v65 = vld [vmem:[%s0 + $0xc8] sm:$0xf]
  %v66 = vld [vmem:[%s0 + $0xcc] sm:$0xf]
  %v67 = vld [vmem:[%s0 + $0xd0] sm:$0xf]
  %v68 = vld [vmem:[%s0 + $0xd4] sm:$0xf]
  %v69 = vld [vmem:[%s0 + $0xd8] sm:$0xf]
  %v70 = vld [vmem:[%s0 + $0xdc] sm:$0xf]
  %v71 = vld [vmem:[%s0 + $0xe0] sm:$0xf]
  %v72 = vld [vmem:[%s0 + $0xe4] sm:$0xf]
  %v73 = vld [vmem:[%s0 + $0xe8] sm:$0xf]
  %v74 = vld [vmem:[%s0 + $0xec] sm:$0xf]
  %v75 = vld [vmem:[%s0 + $0xf0] sm:$0xf]
  %v76 = vld [vmem:[%s0 + $0xf4] sm:$0xf]
  %v77 = vld [vmem:[%s0 + $0xf8] sm:$0xf]
  %v78 = vld [vmem:[%s0 + $0xfc] sm:$0xf]
  %v79 = vld [vmem:[%s1] sm:$0x3]
  %v80 = vld [vmem:[%s2] sm:$0x1]
  %v82 = vperm.slane %v80, 0
  %v148 = vunpack.c.l.b16 %v15
  %v149 = vunpack.c.l.b16 %v16
  %v150 = vunpack.c.l.b16 %v17
  %v151 = vunpack.c.l.b16 %v18
  %v152 = vunpack.c.l.b16 %v19
  %v153 = vunpack.c.l.b16 %v20
  %v154 = vunpack.c.l.b16 %v21
  %v155 = vunpack.c.l.b16 %v22
  %v156 = vunpack.c.l.b16 %v23
  %v157 = vunpack.c.l.b16 %v24
  %v158 = vunpack.c.l.b16 %v25
  %v159 = vunpack.c.l.b16 %v26
  %v160 = vunpack.c.l.b16 %v27
  %v161 = vunpack.c.l.b16 %v28
  %v162 = vunpack.c.l.b16 %v29
  %v163 = vunpack.c.l.b16 %v30
  %v164 = vunpack.c.l.b16 %v31
  %v165 = vunpack.c.l.b16 %v32
  %v166 = vunpack.c.l.b16 %v33
  %v167 = vunpack.c.l.b16 %v34
  %v168 = vunpack.c.l.b16 %v35
  %v169 = vunpack.c.l.b16 %v36
  %v170 = vunpack.c.l.b16 %v37
  %v171 = vunpack.c.l.b16 %v38
  %v172 = vunpack.c.l.b16 %v39
  %v173 = vunpack.c.l.b16 %v40
  %v174 = vunpack.c.l.b16 %v41
  %v175 = vunpack.c.l.b16 %v42
  %v176 = vunpack.c.l.b16 %v43
  %v177 = vunpack.c.l.b16 %v44
  %v178 = vunpack.c.l.b16 %v45
  %v179 = vunpack.c.l.b16 %v46
  %v180 = vunpack.c.l.b16 %v47
  %v181 = vunpack.c.l.b16 %v48
  %v182 = vunpack.c.l.b16 %v49
  %v183 = vunpack.c.l.b16 %v50
  %v184 = vunpack.c.l.b16 %v51
  %v185 = vunpack.c.l.b16 %v52
  %v186 = vunpack.c.l.b16 %v53
  %v187 = vunpack.c.l.b16 %v54
  %v188 = vunpack.c.l.b16 %v55
  %v189 = vunpack.c.l.b16 %v56
  %v190 = vunpack.c.l.b16 %v57
  %v191 = vunpack.c.l.b16 %v58
  %v192 = vunpack.c.l.b16 %v59
  %v193 = vunpack.c.l.b16 %v60
  %v194 = vunpack.c.l.b16 %v61
  %v195 = vunpack.c.l.b16 %v62
  %v196 = vunpack.c.l.b16 %v63
  %v197 = vunpack.c.l.b16 %v64
  %v198 = vunpack.c.l.b16 %v65
  %v199 = vunpack.c.l.b16 %v66
  %v200 = vunpack.c.l.b16 %v67
  %v201 = vunpack.c.l.b16 %v68
  %v202 = vunpack.c.l.b16 %v69
  %v203 = vunpack.c.l.b16 %v70
  %v204 = vunpack.c.l.b16 %v71
  %v205 = vunpack.c.l.b16 %v72
  %v206 = vunpack.c.l.b16 %v73
  %v207 = vunpack.c.l.b16 %v74
  %v208 = vunpack.c.l.b16 %v75
  %v209 = vunpack.c.l.b16 %v76
  %v210 = vunpack.c.l.b16 %v77
  %v211 = vunpack.c.l.b16 %v78
  %v212 = vpack.c.b16 %v149, %v148
  %v213 = vpack.c.b16 %v151, %v150
  %v214 = vpack.c.b16 %v153, %v152
  %v215 = vpack.c.b16 %v155, %v154
  %v216 = vpack.c.b16 %v157, %v156
  %v217 = vpack.c.b16 %v159, %v158
  %v218 = vpack.c.b16 %v161, %v160
  %v219 = vpack.c.b16 %v163, %v162
  %v220 = vpack.c.b16 %v165, %v164
  %v221 = vpack.c.b16 %v167, %v166
  %v222 = vpack.c.b16 %v169, %v168
  %v223 = vpack.c.b16 %v171, %v170
  %v224 = vpack.c.b16 %v173, %v172
  %v225 = vpack.c.b16 %v175, %v174
  %v226 = vpack.c.b16 %v177, %v176
  %v227 = vpack.c.b16 %v179, %v178
  %v228 = vpack.c.b16 %v181, %v180
  %v229 = vpack.c.b16 %v183, %v182
  %v230 = vpack.c.b16 %v185, %v184
  %v231 = vpack.c.b16 %v187, %v186
  %v232 = vpack.c.b16 %v189, %v188
  %v233 = vpack.c.b16 %v191, %v190
  %v234 = vpack.c.b16 %v193, %v192
  %v235 = vpack.c.b16 %v195, %v194
  %v236 = vpack.c.b16 %v197, %v196
  %v237 = vpack.c.b16 %v199, %v198
  %v238 = vpack.c.b16 %v201, %v200
  %v239 = vpack.c.b16 %v203, %v202
  %v240 = vpack.c.b16 %v205, %v204
  %v241 = vpack.c.b16 %v207, %v206
  %v242 = vpack.c.b16 %v209, %v208
  %v243 = vpack.c.b16 %v211, %v210
  %vm244 = vcmask 23552
  %v246 = vsel %vm244, %v212, 0
  %v249 = vsel %vm244, %v213, 0
  %v252 = vsel %vm244, %v214, 0
  %v255 = vsel %vm244, %v215, 0
  %v258 = vsel %vm244, %v216, 0
  %v261 = vsel %vm244, %v217, 0
  %v264 = vsel %vm244, %v218, 0
  %v267 = vsel %vm244, %v219, 0
  %v270 = vsel %vm244, %v220, 0
  %v273 = vsel %vm244, %v221, 0
  %v276 = vsel %vm244, %v222, 0
  %v279 = vsel %vm244, %v223, 0
  %v282 = vsel %vm244, %v224, 0
  %v285 = vsel %vm244, %v225, 0
  %v288 = vsel %vm244, %v226, 0
  %v291 = vsel %vm244, %v227, 0
  %v294 = vsel %vm244, %v228, 0
  %v297 = vsel %vm244, %v229, 0
  %v300 = vsel %vm244, %v230, 0
  %v303 = vsel %vm244, %v231, 0
  %v306 = vsel %vm244, %v232, 0
  %v309 = vsel %vm244, %v233, 0
  %v312 = vsel %vm244, %v234, 0
  %v315 = vsel %vm244, %v235, 0
  %v318 = vsel %vm244, %v236, 0
  %v321 = vsel %vm244, %v237, 0
  %v324 = vsel %vm244, %v238, 0
  %v327 = vsel %vm244, %v239, 0
  %v330 = vsel %vm244, %v240, 0
  %v333 = vsel %vm244, %v241, 0
  %v336 = vsel %vm244, %v242, 0
  %v339 = vsel %vm244, %v243, 0
  %vm341 = vcmask 1040384
  %vm342 = vcmask 1041408
  %v343 = vsel %vm341, 4294967295, 65535
  %v344 = vsel %vm342, %v343, 0
  %v346 = vand.u32 %v79, %v344
  %348 = vmatpush.bf16.msra.mxu0 0
  %349 = vmatpush.bf16.msra.mxu0 0
  %350 = vmatpush.bf16.msra.mxu0 0
  %351 = vmatpush.bf16.msra.mxu0 0
  %352 = vmatpush.bf16.msra.mxu0 0
  %353 = vmatpush.bf16.msra.mxu0 0
  %354 = vmatpush.bf16.msra.mxu0 0
  %355 = vmatpush.bf16.msra.mxu0 %v346
  %356 = vmatmul.bf16.gmra.mxu0 %v246
  %v357 = vpop.f32.mrf.mxu0
  %v358 = vadd.f32 %v82, %v357
  %v359 = vpop.f32.mrf.mxu0
  %v360 = vadd.f32 %v82, %v359
  %361 = vmatmul.bf16.gmra.mxu0 %v249
  %v362 = vpop.f32.mrf.mxu0
  %v363 = vadd.f32 %v82, %v362
  %v364 = vpop.f32.mrf.mxu0
  %v365 = vadd.f32 %v82, %v364
  %366 = vmatmul.bf16.gmra.mxu0 %v252
  %v367 = vpop.f32.mrf.mxu0
  %v368 = vadd.f32 %v82, %v367
  %v369 = vpop.f32.mrf.mxu0
  %v370 = vadd.f32 %v82, %v369
  %371 = vmatmul.bf16.gmra.mxu0 %v255
  %v372 = vpop.f32.mrf.mxu0
  %v373 = vadd.f32 %v82, %v372
  %v374 = vpop.f32.mrf.mxu0
  %v375 = vadd.f32 %v82, %v374
  %376 = vmatmul.bf16.gmra.mxu0 %v258
  %v377 = vpop.f32.mrf.mxu0
  %v378 = vadd.f32 %v82, %v377
  %v379 = vpop.f32.mrf.mxu0
  %v380 = vadd.f32 %v82, %v379
  %381 = vmatmul.bf16.gmra.mxu0 %v261
  %v382 = vpop.f32.mrf.mxu0
  %v383 = vadd.f32 %v82, %v382
  %v384 = vpop.f32.mrf.mxu0
  %v385 = vadd.f32 %v82, %v384
  %386 = vmatmul.bf16.gmra.mxu0 %v264
  %v387 = vpop.f32.mrf.mxu0
  %v388 = vadd.f32 %v82, %v387
  %v389 = vpop.f32.mrf.mxu0
  %v390 = vadd.f32 %v82, %v389
  %391 = vmatmul.bf16.gmra.mxu0 %v267
  %v392 = vpop.f32.mrf.mxu0
  %v393 = vadd.f32 %v82, %v392
  %v394 = vpop.f32.mrf.mxu0
  %v395 = vadd.f32 %v82, %v394
  %396 = vmatmul.bf16.gmra.mxu0 %v270
  %v397 = vpop.f32.mrf.mxu0
  %v398 = vadd.f32 %v82, %v397
  %v399 = vpop.f32.mrf.mxu0
  %v400 = vadd.f32 %v82, %v399
  %401 = vmatmul.bf16.gmra.mxu0 %v273
  %v402 = vpop.f32.mrf.mxu0
  %v403 = vadd.f32 %v82, %v402
  %v404 = vpop.f32.mrf.mxu0
  %v405 = vadd.f32 %v82, %v404
  %406 = vmatmul.bf16.gmra.mxu0 %v276
  %v407 = vpop.f32.mrf.mxu0
  %v408 = vadd.f32 %v82, %v407
  %v409 = vpop.f32.mrf.mxu0
  %v410 = vadd.f32 %v82, %v409
  %411 = vmatmul.bf16.gmra.mxu0 %v279
  %v412 = vpop.f32.mrf.mxu0
  %v413 = vadd.f32 %v82, %v412
  %v414 = vpop.f32.mrf.mxu0
  %v415 = vadd.f32 %v82, %v414
  %416 = vmatmul.bf16.gmra.mxu0 %v282
  %v417 = vpop.f32.mrf.mxu0
  %v418 = vadd.f32 %v82, %v417
  %v419 = vpop.f32.mrf.mxu0
  %v420 = vadd.f32 %v82, %v419
  %421 = vmatmul.bf16.gmra.mxu0 %v285
  %v422 = vpop.f32.mrf.mxu0
  %v423 = vadd.f32 %v82, %v422
  %v424 = vpop.f32.mrf.mxu0
  %v425 = vadd.f32 %v82, %v424
  %426 = vmatmul.bf16.gmra.mxu0 %v288
  %v427 = vpop.f32.mrf.mxu0
  %v428 = vadd.f32 %v82, %v427
  %v429 = vpop.f32.mrf.mxu0
  %v430 = vadd.f32 %v82, %v429
  %431 = vmatmul.bf16.gmra.mxu0 %v291
  %v432 = vpop.f32.mrf.mxu0
  %v433 = vadd.f32 %v82, %v432
  %v434 = vpop.f32.mrf.mxu0
  %v435 = vadd.f32 %v82, %v434
  %436 = vmatmul.bf16.gmra.mxu0 %v294
  %v437 = vpop.f32.mrf.mxu0
  %v438 = vadd.f32 %v82, %v437
  %v439 = vpop.f32.mrf.mxu0
  %v440 = vadd.f32 %v82, %v439
  %441 = vmatmul.bf16.gmra.mxu0 %v297
  %v442 = vpop.f32.mrf.mxu0
  %v443 = vadd.f32 %v82, %v442
  %v444 = vpop.f32.mrf.mxu0
  %v445 = vadd.f32 %v82, %v444
  %446 = vmatmul.bf16.gmra.mxu0 %v300
  %v447 = vpop.f32.mrf.mxu0
  %v448 = vadd.f32 %v82, %v447
  %v449 = vpop.f32.mrf.mxu0
  %v450 = vadd.f32 %v82, %v449
  %451 = vmatmul.bf16.gmra.mxu0 %v303
  %v452 = vpop.f32.mrf.mxu0
  %v453 = vadd.f32 %v82, %v452
  %v454 = vpop.f32.mrf.mxu0
  %v455 = vadd.f32 %v82, %v454
  %456 = vmatmul.bf16.gmra.mxu0 %v306
  %v457 = vpop.f32.mrf.mxu0
  %v458 = vadd.f32 %v82, %v457
  %v459 = vpop.f32.mrf.mxu0
  %v460 = vadd.f32 %v82, %v459
  %461 = vmatmul.bf16.gmra.mxu0 %v309
  %v462 = vpop.f32.mrf.mxu0
  %v463 = vadd.f32 %v82, %v462
  %v464 = vpop.f32.mrf.mxu0
  %v465 = vadd.f32 %v82, %v464
  %466 = vmatmul.bf16.gmra.mxu0 %v312
  %v467 = vpop.f32.mrf.mxu0
  %v468 = vadd.f32 %v82, %v467
  %v469 = vpop.f32.mrf.mxu0
  %v470 = vadd.f32 %v82, %v469
  %471 = vmatmul.bf16.gmra.mxu0 %v315
  %v472 = vpop.f32.mrf.mxu0
  %v473 = vadd.f32 %v82, %v472
  %v474 = vpop.f32.mrf.mxu0
  %v475 = vadd.f32 %v82, %v474
  %476 = vmatmul.bf16.gmra.mxu0 %v318
  %v477 = vpop.f32.mrf.mxu0
  %v478 = vadd.f32 %v82, %v477
  %v479 = vpop.f32.mrf.mxu0
  %v480 = vadd.f32 %v82, %v479
  %481 = vmatmul.bf16.gmra.mxu0 %v321
  %v482 = vpop.f32.mrf.mxu0
  %v483 = vadd.f32 %v82, %v482
  %v484 = vpop.f32.mrf.mxu0
  %v485 = vadd.f32 %v82, %v484
  %486 = vmatmul.bf16.gmra.mxu0 %v324
  %v487 = vpop.f32.mrf.mxu0
  %v488 = vadd.f32 %v82, %v487
  %v489 = vpop.f32.mrf.mxu0
  %v490 = vadd.f32 %v82, %v489
  %491 = vmatmul.bf16.gmra.mxu0 %v327
  %v492 = vpop.f32.mrf.mxu0
  %v493 = vadd.f32 %v82, %v492
  %v494 = vpop.f32.mrf.mxu0
  %v495 = vadd.f32 %v82, %v494
  %496 = vmatmul.bf16.gmra.mxu0 %v330
  %v497 = vpop.f32.mrf.mxu0
  %v498 = vadd.f32 %v82, %v497
  %v499 = vpop.f32.mrf.mxu0
  %v500 = vadd.f32 %v82, %v499
  %501 = vmatmul.bf16.gmra.mxu0 %v333
  %v502 = vpop.f32.mrf.mxu0
  %v503 = vadd.f32 %v82, %v502
  %v504 = vpop.f32.mrf.mxu0
  %v505 = vadd.f32 %v82, %v504
  %506 = vmatmul.bf16.gmra.mxu0 %v336
  %v507 = vpop.f32.mrf.mxu0
  %v508 = vadd.f32 %v82, %v507
  %v509 = vpop.f32.mrf.mxu0
  %v510 = vadd.f32 %v82, %v509
  %511 = vmatmul.bf16.gmra.mxu0 %v339
  %v512 = vpop.f32.mrf.mxu0
  %v513 = vadd.f32 %v82, %v512
  %v514 = vpop.f32.mrf.mxu0
  %v515 = vadd.f32 %v82, %v514
  %516 = vdwg.mxu0
  %v517 = vpack.c.bf16 %v358, %v358
  %v518 = vpack.c.bf16 %v360, %v360
  %v519 = vpack.c.bf16 %v363, %v363
  %v520 = vpack.c.bf16 %v365, %v365
  %v521 = vpack.c.bf16 %v368, %v368
  %v522 = vpack.c.bf16 %v370, %v370
  %v523 = vpack.c.bf16 %v373, %v373
  %v524 = vpack.c.bf16 %v375, %v375
  %v525 = vpack.c.bf16 %v378, %v378
  %v526 = vpack.c.bf16 %v380, %v380
  %v527 = vpack.c.bf16 %v383, %v383
  %v528 = vpack.c.bf16 %v385, %v385
  %v529 = vpack.c.bf16 %v388, %v388
  %v530 = vpack.c.bf16 %v390, %v390
  %v531 = vpack.c.bf16 %v393, %v393
  %v532 = vpack.c.bf16 %v395, %v395
  %v533 = vpack.c.bf16 %v398, %v398
  %v534 = vpack.c.bf16 %v400, %v400
  %v535 = vpack.c.bf16 %v403, %v403
  %v536 = vpack.c.bf16 %v405, %v405
  %v537 = vpack.c.bf16 %v408, %v408
  %v538 = vpack.c.bf16 %v410, %v410
  %v539 = vpack.c.bf16 %v413, %v413
  %v540 = vpack.c.bf16 %v415, %v415
  %v541 = vpack.c.bf16 %v418, %v418
  %v542 = vpack.c.bf16 %v420, %v420
  %v543 = vpack.c.bf16 %v423, %v423
  %v544 = vpack.c.bf16 %v425, %v425
  %v545 = vpack.c.bf16 %v428, %v428
  %v546 = vpack.c.bf16 %v430, %v430
  %v547 = vpack.c.bf16 %v433, %v433
  %v548 = vpack.c.bf16 %v435, %v435
  %v549 = vpack.c.bf16 %v438, %v438
  %v550 = vpack.c.bf16 %v440, %v440
  %v551 = vpack.c.bf16 %v443, %v443
  %v552 = vpack.c.bf16 %v445, %v445
  %v553 = vpack.c.bf16 %v448, %v448
  %v554 = vpack.c.bf16 %v450, %v450
  %v555 = vpack.c.bf16 %v453, %v453
  %v556 = vpack.c.bf16 %v455, %v455
  %v557 = vpack.c.bf16 %v458, %v458
  %v558 = vpack.c.bf16 %v460, %v460
  %v559 = vpack.c.bf16 %v463, %v463
  %v560 = vpack.c.bf16 %v465, %v465
  %v561 = vpack.c.bf16 %v468, %v468
  %v562 = vpack.c.bf16 %v470, %v470
  %v563 = vpack.c.bf16 %v473, %v473
  %v564 = vpack.c.bf16 %v475, %v475
  %v565 = vpack.c.bf16 %v478, %v478
  %v566 = vpack.c.bf16 %v480, %v480
  %v567 = vpack.c.bf16 %v483, %v483
  %v568 = vpack.c.bf16 %v485, %v485
  %v569 = vpack.c.bf16 %v488, %v488
  %v570 = vpack.c.bf16 %v490, %v490
  %v571 = vpack.c.bf16 %v493, %v493
  %v572 = vpack.c.bf16 %v495, %v495
  %v573 = vpack.c.bf16 %v498, %v498
  %v574 = vpack.c.bf16 %v500, %v500
  %v575 = vpack.c.bf16 %v503, %v503
  %v576 = vpack.c.bf16 %v505, %v505
  %v577 = vpack.c.bf16 %v508, %v508
  %v578 = vpack.c.bf16 %v510, %v510
  %v579 = vpack.c.bf16 %v513, %v513
  %v580 = vpack.c.bf16 %v515, %v515
  %vm581 = vcmask 27648
  %582 = vst.msk [vmem:[%s3] sm:$0xf] %vm581, %v517
  %583 = vst.msk [vmem:[%s3 + $0x4] sm:$0xf] %vm581, %v518
  %584 = vst.msk [vmem:[%s3 + $0x8] sm:$0xf] %vm581, %v519
  %585 = vst.msk [vmem:[%s3 + $0xc] sm:$0xf] %vm581, %v520
  %586 = vst.msk [vmem:[%s3 + $0x10] sm:$0xf] %vm581, %v521
  %587 = vst.msk [vmem:[%s3 + $0x14] sm:$0xf] %vm581, %v522
  %588 = vst.msk [vmem:[%s3 + $0x18] sm:$0xf] %vm581, %v523
  %589 = vst.msk [vmem:[%s3 + $0x1c] sm:$0xf] %vm581, %v524
  %590 = vst.msk [vmem:[%s3 + $0x20] sm:$0xf] %vm581, %v525
  %591 = vst.msk [vmem:[%s3 + $0x24] sm:$0xf] %vm581, %v526
  %592 = vst.msk [vmem:[%s3 + $0x28] sm:$0xf] %vm581, %v527
  %593 = vst.msk [vmem:[%s3 + $0x2c] sm:$0xf] %vm581, %v528
  %594 = vst.msk [vmem:[%s3 + $0x30] sm:$0xf] %vm581, %v529
  %595 = vst.msk [vmem:[%s3 + $0x34] sm:$0xf] %vm581, %v530
  %596 = vst.msk [vmem:[%s3 + $0x38] sm:$0xf] %vm581, %v531
  %597 = vst.msk [vmem:[%s3 + $0x3c] sm:$0xf] %vm581, %v532
  %598 = vst.msk [vmem:[%s3 + $0x40] sm:$0xf] %vm581, %v533
  %599 = vst.msk [vmem:[%s3 + $0x44] sm:$0xf] %vm581, %v534
  %600 = vst.msk [vmem:[%s3 + $0x48] sm:$0xf] %vm581, %v535
  %601 = vst.msk [vmem:[%s3 + $0x4c] sm:$0xf] %vm581, %v536
  %602 = vst.msk [vmem:[%s3 + $0x50] sm:$0xf] %vm581, %v537
  %603 = vst.msk [vmem:[%s3 + $0x54] sm:$0xf] %vm581, %v538
  %604 = vst.msk [vmem:[%s3 + $0x58] sm:$0xf] %vm581, %v539
  %605 = vst.msk [vmem:[%s3 + $0x5c] sm:$0xf] %vm581, %v540
  %606 = vst.msk [vmem:[%s3 + $0x60] sm:$0xf] %vm581, %v541
  %607 = vst.msk [vmem:[%s3 + $0x64] sm:$0xf] %vm581, %v542
  %608 = vst.msk [vmem:[%s3 + $0x68] sm:$0xf] %vm581, %v543
  %609 = vst.msk [vmem:[%s3 + $0x6c] sm:$0xf] %vm581, %v544
  %610 = vst.msk [vmem:[%s3 + $0x70] sm:$0xf] %vm581, %v545
  %611 = vst.msk [vmem:[%s3 + $0x74] sm:$0xf] %vm581, %v546
  %612 = vst.msk [vmem:[%s3 + $0x78] sm:$0xf] %vm581, %v547
  %613 = vst.msk [vmem:[%s3 + $0x7c] sm:$0xf] %vm581, %v548
  %614 = vst.msk [vmem:[%s3 + $0x80] sm:$0xf] %vm581, %v549
  %615 = vst.msk [vmem:[%s3 + $0x84] sm:$0xf] %vm581, %v550
  %616 = vst.msk [vmem:[%s3 + $0x88] sm:$0xf] %vm581, %v551
  %617 = vst.msk [vmem:[%s3 + $0x8c] sm:$0xf] %vm581, %v552
  %618 = vst.msk [vmem:[%s3 + $0x90] sm:$0xf] %vm581, %v553
  %619 = vst.msk [vmem:[%s3 + $0x94] sm:$0xf] %vm581, %v554
  %620 = vst.msk [vmem:[%s3 + $0x98] sm:$0xf] %vm581, %v555
  %621 = vst.msk [vmem:[%s3 + $0x9c] sm:$0xf] %vm581, %v556
  %622 = vst.msk [vmem:[%s3 + $0xa0] sm:$0xf] %vm581, %v557
  %623 = vst.msk [vmem:[%s3 + $0xa4] sm:$0xf] %vm581, %v558
  %624 = vst.msk [vmem:[%s3 + $0xa8] sm:$0xf] %vm581, %v559
  %625 = vst.msk [vmem:[%s3 + $0xac] sm:$0xf] %vm581, %v560
  %626 = vst.msk [vmem:[%s3 + $0xb0] sm:$0xf] %vm581, %v561
  %627 = vst.msk [vmem:[%s3 + $0xb4] sm:$0xf] %vm581, %v562
  %628 = vst.msk [vmem:[%s3 + $0xb8] sm:$0xf] %vm581, %v563
  %629 = vst.msk [vmem:[%s3 + $0xbc] sm:$0xf] %vm581, %v564
  %630 = vst.msk [vmem:[%s3 + $0xc0] sm:$0xf] %vm581, %v565
  %631 = vst.msk [vmem:[%s3 + $0xc4] sm:$0xf] %vm581, %v566
  %632 = vst.msk [vmem:[%s3 + $0xc8] sm:$0xf] %vm581, %v567
  %633 = vst.msk [vmem:[%s3 + $0xcc] sm:$0xf] %vm581, %v568
  %634 = vst.msk [vmem:[%s3 + $0xd0] sm:$0xf] %vm581, %v569
  %635 = vst.msk [vmem:[%s3 + $0xd4] sm:$0xf] %vm581, %v570
  %636 = vst.msk [vmem:[%s3 + $0xd8] sm:$0xf] %vm581, %v571
  %637 = vst.msk [vmem:[%s3 + $0xdc] sm:$0xf] %vm581, %v572
  %638 = vst.msk [vmem:[%s3 + $0xe0] sm:$0xf] %vm581, %v573
  %639 = vst.msk [vmem:[%s3 + $0xe4] sm:$0xf] %vm581, %v574
  %640 = vst.msk [vmem:[%s3 + $0xe8] sm:$0xf] %vm581, %v575
  %641 = vst.msk [vmem:[%s3 + $0xec] sm:$0xf] %vm581, %v576
  %642 = vst.msk [vmem:[%s3 + $0xf0] sm:$0xf] %vm581, %v577
  %643 = vst.msk [vmem:[%s3 + $0xf4] sm:$0xf] %vm581, %v578
  %644 = vst.msk [vmem:[%s3 + $0xf8] sm:$0xf] %vm581, %v579
  %645 = vst.msk [vmem:[%s3 + $0xfc] sm:$0xf] %vm581, %v580
  // Predicated region
  $region14: #{_lambda_.6} parent=0 // pred_check
    _
  $region15: #{_lambda_.6} parent=0 // pred_check_branch
    %647 = sbr.rel (0) target = $region17
  $region16: #{_lambda_.6} parent=0 // pred_region
    _
  $region17: #{_lambda_.6} parent=0 // pred_fallthru
    _
  // Predicated region
  $region18: #{_lambda_.6} parent=0 // pred_check
    _
  $region19: #{_lambda_.6} parent=0 // pred_check_branch
    %649 = sbr.rel (0) target = $region21
  $region20: #{_lambda_.6} parent=0 // pred_region
    _
  $region21: #{_lambda_.6} parent=0 // pred_fallthru
    _

// kernel: _lambda_.7
$region0: #{_lambda_.7}
  #allocation0 [shape = 'u32[]', space=smem, size = 0x4, offset = 0x4, fixed_abs, tag = 'smem constant byte address 0x4 - core index']
  #allocation1 [shape = 'u32[72,128]{1,0:T(1,128)}', space=vmem, size = 0x9000, scoped, tag = 'internal scratch']
  %s0 = inlined_call_operand.vmem [shape: bf16[128,36], index: 0, kind: input, shape index: {}]
  %s1 = inlined_call_operand.vmem [shape: bf16[36,8], index: 1, kind: input, shape index: {}]
  %s2 = inlined_call_operand.vmem [shape: bf16[128,8], index: 2, kind: output, shape index: {0}]
  %s3 = inlined_call_operand.vmem [shape: f32[8,8], index: 3, kind: output, shape index: {1}]
  %s4 = inlined_call_operand.vmem [shape: f32[8,8], index: 4, kind: output, shape index: {2}]
  %5 = xla_tuple %s2, %s3, %s4
  %s6 = sld [smem:[#allocation0]]
  $region38: #{_lambda_.7} parent=0
    _
  %s8 = ssub.s32 1, %s6
  %s9 = scalar_select 0, %s8, %s6
  // Predicated region
  $region2: #{_lambda_.7} parent=0 // pred_check
    _
  $region3: #{_lambda_.7} parent=0 // pred_check_branch
    %11 = sbr.rel (0) target = $region5
  $region4: #{_lambda_.7} parent=0 // pred_region
    %s12 = sadd.s32 0, 0
    %s13 = smul.u32 16, %s12
    %p14 = scmp.lt.s32.totalorder %s13, 15
    %s15 = scalar_select %p14, %s13, 15
    %s16 = smul.addr %s15, 4
    %s17 = scalar_lea.vmem %s0, %s16
    %s18 = sadd.s32 0, 0
    %s19 = smul.u32 16, %s18
  $region5: #{_lambda_.7} parent=0 // pred_fallthru
    _
  // Predicated region
  $region6: #{_lambda_.7} parent=0 // pred_check
    _
  $region7: #{_lambda_.7} parent=0 // pred_check_branch
    %21 = sbr.rel (0) target = $region9
  $region8: #{_lambda_.7} parent=0 // pred_region
    _
  $region9: #{_lambda_.7} parent=0 // pred_fallthru
    _
  %s22 = sadd.s32 0, 0
  %s23 = smul.u32 16, %s22
  %p24 = scmp.lt.s32.totalorder %s23, 15
  %s25 = scalar_select %p24, %s23, 15
  %s26 = smul.addr %s25, 4
  %s27 = scalar_lea.vmem %s0, %s26
  %s28 = sadd.s32 0, 0
  %s29 = smul.u32 16, %s28
  %p30 = scmp.lt.s32.totalorder %s29, 15
  %s31 = scalar_select %p30, %s29, 15
  %s32 = smul.addr %s31, 4
  %s33 = scalar_lea.vmem %s2, %s32
  %s34 = sadd.s32 0, 0
  %s35 = smul.u32 16, %s34
  %p36 = scmp.lt.s32.totalorder %s35, 15
  %s37 = scalar_select %p36, %s35, 15
  %s38 = smul.addr %s37, 4
  %s39 = scalar_lea.vmem %s0, %s38
  %s40 = sadd.s32 0, 0
  %s41 = smul.u32 16, %s40
  %s42 = sadd.s32 0, 0
  %s43 = smul.u32 16, %s42
  %p44 = scmp.lt.s32.totalorder %s43, 15
  %s45 = scalar_select %p44, %s43, 15
  %s46 = smul.addr %s45, 4
  %s47 = scalar_lea.vmem %s2, %s46
  %s48 = sadd.s32 0, 0
  %s49 = smul.u32 16, %s48
  %v51 = vld [vmem:[%s39] sm:$0xf]
  %v52 = vld [vmem:[%s39 + $0x4] sm:$0xf]
  %v53 = vld [vmem:[%s39 + $0x8] sm:$0xf]
  %v54 = vld [vmem:[%s39 + $0xc] sm:$0xf]
  %v55 = vld [vmem:[%s39 + $0x10] sm:$0xf]
  %v56 = vld [vmem:[%s39 + $0x14] sm:$0xf]
  %v57 = vld [vmem:[%s39 + $0x18] sm:$0xf]
  %v58 = vld [vmem:[%s39 + $0x1c] sm:$0xf]
  %v59 = vld [vmem:[%s39 + $0x20] sm:$0xf]
  %v60 = vld [vmem:[%s39 + $0x24] sm:$0xf]
  %v61 = vld [vmem:[%s39 + $0x28] sm:$0xf]
  %v62 = vld [vmem:[%s39 + $0x2c] sm:$0xf]
  %v63 = vld [vmem:[%s39 + $0x30] sm:$0xf]
  %v64 = vld [vmem:[%s39 + $0x34] sm:$0xf]
  %v65 = vld [vmem:[%s39 + $0x38] sm:$0xf]
  %v66 = vld [vmem:[%s39 + $0x3c] sm:$0xf]
  %v67 = vld [vmem:[%s1] sm:$0xf]
  %v68 = vld [vmem:[%s1 + $0x4] sm:$0xf]
  %v69 = vld [vmem:[%s1 + $0x8] sm:$0xf]
  %v70 = vld [vmem:[%s1 + $0xc] sm:$0xf]
  %v71 = vld [vmem:[%s1 + $0x10] sm:$0x3]
  %v88 = vunpack.c.l.b16 %v51
  %v89 = vunpack.c.l.b16 %v52
  %v90 = vunpack.c.l.b16 %v53
  %v91 = vunpack.c.l.b16 %v54
  %v92 = vunpack.c.l.b16 %v55
  %v93 = vunpack.c.l.b16 %v56
  %v94 = vunpack.c.l.b16 %v57
  %v95 = vunpack.c.l.b16 %v58
  %v96 = vunpack.c.l.b16 %v59
  %v97 = vunpack.c.l.b16 %v60
  %v98 = vunpack.c.l.b16 %v61
  %v99 = vunpack.c.l.b16 %v62
  %v100 = vunpack.c.l.b16 %v63
  %v101 = vunpack.c.l.b16 %v64
  %v102 = vunpack.c.l.b16 %v65
  %v103 = vunpack.c.l.b16 %v66
  %v104 = vpack.c.b16 %v89, %v88
  %v105 = vpack.c.b16 %v91, %v90
  %v106 = vpack.c.b16 %v93, %v92
  %v107 = vpack.c.b16 %v95, %v94
  %v108 = vpack.c.b16 %v97, %v96
  %v109 = vpack.c.b16 %v99, %v98
  %v110 = vpack.c.b16 %v101, %v100
  %v111 = vpack.c.b16 %v103, %v102
  %v117 = vunpack.c.l.b16 %v67
  %v118 = vunpack.c.l.b16 %v68
  %v119 = vunpack.c.l.b16 %v69
  %v120 = vunpack.c.l.b16 %v70
  %v121 = vunpack.c.l.b16 %v71
  %v122 = vpack.c.b16 %v118, %v117
  %v123 = vpack.c.b16 %v120, %v119
  %v124 = vpack.c.b16 %v121, %v121
  %vm127 = vcmask 293888
  %v129 = vsel %vm127, %v104, 0
  %v132 = vsel %vm127, %v105, 0
  %v135 = vsel %vm127, %v106, 0
  %v138 = vsel %vm127, %v107, 0
  %v141 = vsel %vm127, %v108, 0
  %v144 = vsel %vm127, %v109, 0
  %v147 = vsel %vm127, %v110, 0
  %v150 = vsel %vm127, %v111, 0
  %vm152 = vcmask 1041408
  %v154 = vsel %vm152, %v124, 0
  %156 = vmatpush.bf16.msra.mxu0 0
  %157 = vmatpush.bf16.msra.mxu0 0
  %158 = vmatpush.bf16.msra.mxu0 0
  %159 = vmatpush.bf16.msra.mxu0 0
  %160 = vmatpush.bf16.msra.mxu0 0
  %161 = vmatpush.bf16.msra.mxu0 %v154
  %162 = vmatpush.bf16.msra.mxu0 %v123
  %163 = vmatpush.bf16.msra.mxu0 %v122
  %164 = vmatmul.bf16.gmra.mxu0 %v129
  %v165 = vpop.f32.mrf.mxu0
  %v166 = vadd.f32 0.0, %v165
  %v167 = vpop.f32.mrf.mxu0
  %v168 = vadd.f32 0.0, %v167
  %169 = vmatmul.bf16.gmra.mxu0 %v132
  %v170 = vpop.f32.mrf.mxu0
  %v171 = vadd.f32 0.0, %v170
  %v172 = vpop.f32.mrf.mxu0
  %v173 = vadd.f32 0.0, %v172
  %174 = vmatmul.bf16.gmra.mxu0 %v135
  %v175 = vpop.f32.mrf.mxu0
  %v176 = vadd.f32 0.0, %v175
  %v177 = vpop.f32.mrf.mxu0
  %v178 = vadd.f32 0.0, %v177
  %179 = vmatmul.bf16.gmra.mxu0 %v138
  %v180 = vpop.f32.mrf.mxu0
  %v181 = vadd.f32 0.0, %v180
  %v182 = vpop.f32.mrf.mxu0
  %v183 = vadd.f32 0.0, %v182
  %184 = vmatmul.bf16.gmra.mxu0 %v141
  %v185 = vpop.f32.mrf.mxu0
  %v186 = vadd.f32 0.0, %v185
  %v187 = vpop.f32.mrf.mxu0
  %v188 = vadd.f32 0.0, %v187
  %189 = vmatmul.bf16.gmra.mxu0 %v144
  %v190 = vpop.f32.mrf.mxu0
  %v191 = vadd.f32 0.0, %v190
  %v192 = vpop.f32.mrf.mxu0
  %v193 = vadd.f32 0.0, %v192
  %194 = vmatmul.bf16.gmra.mxu0 %v147
  %v195 = vpop.f32.mrf.mxu0
  %v196 = vadd.f32 0.0, %v195
  %v197 = vpop.f32.mrf.mxu0
  %v198 = vadd.f32 0.0, %v197
  %199 = vmatmul.bf16.gmra.mxu0 %v150
  %v200 = vpop.f32.mrf.mxu0
  %v201 = vadd.f32 0.0, %v200
  %v202 = vpop.f32.mrf.mxu0
  %v203 = vadd.f32 0.0, %v202
  %204 = vdwg.mxu0
  %v205 = vpack.c.bf16 %v166, %v166
  %v206 = vpack.c.bf16 %v168, %v168
  %v207 = vpack.c.bf16 %v171, %v171
  %v208 = vpack.c.bf16 %v173, %v173
  %v209 = vpack.c.bf16 %v176, %v176
  %v210 = vpack.c.bf16 %v178, %v178
  %v211 = vpack.c.bf16 %v181, %v181
  %v212 = vpack.c.bf16 %v183, %v183
  %v213 = vpack.c.bf16 %v186, %v186
  %v214 = vpack.c.bf16 %v188, %v188
  %v215 = vpack.c.bf16 %v191, %v191
  %v216 = vpack.c.bf16 %v193, %v193
  %v217 = vpack.c.bf16 %v196, %v196
  %v218 = vpack.c.bf16 %v198, %v198
  %v219 = vpack.c.bf16 %v201, %v201
  %v220 = vpack.c.bf16 %v203, %v203
  %vm221 = vcmask 60416
  %222 = vst.msk [vmem:[%s47] sm:$0xf] %vm221, %v205
  %223 = vst.msk [vmem:[%s47 + $0x4] sm:$0xf] %vm221, %v206
  %224 = vst.msk [vmem:[%s47 + $0x8] sm:$0xf] %vm221, %v207
  %225 = vst.msk [vmem:[%s47 + $0xc] sm:$0xf] %vm221, %v208
  %226 = vst.msk [vmem:[%s47 + $0x10] sm:$0xf] %vm221, %v209
  %227 = vst.msk [vmem:[%s47 + $0x14] sm:$0xf] %vm221, %v210
  %228 = vst.msk [vmem:[%s47 + $0x18] sm:$0xf] %vm221, %v211
  %229 = vst.msk [vmem:[%s47 + $0x1c] sm:$0xf] %vm221, %v212
  %230 = vst.msk [vmem:[%s47 + $0x20] sm:$0xf] %vm221, %v213
  %231 = vst.msk [vmem:[%s47 + $0x24] sm:$0xf] %vm221, %v214
  %232 = vst.msk [vmem:[%s47 + $0x28] sm:$0xf] %vm221, %v215
  %233 = vst.msk [vmem:[%s47 + $0x2c] sm:$0xf] %vm221, %v216
  %234 = vst.msk [vmem:[%s47 + $0x30] sm:$0xf] %vm221, %v217
  %235 = vst.msk [vmem:[%s47 + $0x34] sm:$0xf] %vm221, %v218
  %236 = vst.msk [vmem:[%s47 + $0x38] sm:$0xf] %vm221, %v219
  %237 = vst.msk [vmem:[%s47 + $0x3c] sm:$0xf] %vm221, %v220
  %p238 = scmp.eq.s32.totalorder 0, 0
  // Predicated region
  $region10: #{_lambda_.7} parent=0 // pred_check
    %p239 = pneg %p238
  $region11: #{_lambda_.7} parent=0 // pred_check_branch
    %241 = sbr.rel (%p239) target = $region13
  $region12: #{_lambda_.7} parent=0 // pred_region
    %vm242 = vcmask 64512
    %243 = vst.msk [vmem:[%s3] sm:$0xff] %vm242, 0.0
    %244 = vst.msk [vmem:[%s4] sm:$0xff] %vm242, 0.0
  $region13: #{_lambda_.7} parent=0 // pred_fallthru
    _
  %vm245 = vcmask 64512
  %v246 = vsel %vm245, %v166, 0.0
  %v247 = vsel %vm245, %v168, 0.0
  %v248 = vadd.f32 %v246, %v247
  %v249 = vsel %vm245, %v171, 0.0
  %v250 = vadd.f32 %v248, %v249
  %v251 = vsel %vm245, %v173, 0.0
  %v252 = vadd.f32 %v250, %v251
  %v253 = vsel %vm245, %v176, 0.0
  %v254 = vadd.f32 %v252, %v253
  %v255 = vsel %vm245, %v178, 0.0
  %v256 = vadd.f32 %v254, %v255
  %v257 = vsel %vm245, %v181, 0.0
  %v258 = vadd.f32 %v256, %v257
  %v259 = vsel %vm245, %v183, 0.0
  %v260 = vadd.f32 %v258, %v259
  %v261 = vsel %vm245, %v186, 0.0
  %v262 = vadd.f32 %v260, %v261
  %v263 = vsel %vm245, %v188, 0.0
  %v264 = vadd.f32 %v262, %v263
  %v265 = vsel %vm245, %v191, 0.0
  %v266 = vadd.f32 %v264, %v265
  %v267 = vsel %vm245, %v193, 0.0
  %v268 = vadd.f32 %v266, %v267
  %v269 = vsel %vm245, %v196, 0.0
  %v270 = vadd.f32 %v268, %v269
  %v271 = vsel %vm245, %v198, 0.0
  %v272 = vadd.f32 %v270, %v271
  %v273 = vsel %vm245, %v201, 0.0
  %v274 = vadd.f32 %v272, %v273
  %v275 = vsel %vm245, %v203, 0.0
  %v276 = vadd.f32 %v274, %v275
  %v277 = vrot.slane %v276, 4
  %v278 = vadd.f32 %v276, %v277
  %v279 = vrot.slane %v278, 2
  %v280 = vadd.f32 %v278, %v279
  %v281 = vrot.slane %v280, 1
  %v282 = vadd.f32 %v280, %v281
  %v283 = vmul.f32 %v166, %v166
  %v284 = vmul.f32 %v168, %v168
  %v285 = vmul.f32 %v171, %v171
  %v286 = vmul.f32 %v173, %v173
  %v287 = vmul.f32 %v176, %v176
  %v288 = vmul.f32 %v178, %v178
  %v289 = vmul.f32 %v181, %v181
  %v290 = vmul.f32 %v183, %v183
  %v291 = vmul.f32 %v186, %v186
  %v292 = vmul.f32 %v188, %v188
  %v293 = vmul.f32 %v191, %v191
  %v294 = vmul.f32 %v193, %v193
  %v295 = vmul.f32 %v196, %v196
  %v296 = vmul.f32 %v198, %v198
  %v297 = vmul.f32 %v201, %v201
  %v298 = vmul.f32 %v203, %v203
  %v299 = vsel %vm245, %v283, 0.0
  %v300 = vsel %vm245, %v284, 0.0
  %v301 = vadd.f32 %v299, %v300
  %v302 = vsel %vm245, %v285, 0.0
  %v303 = vadd.f32 %v301, %v302
  %v304 = vsel %vm245, %v286, 0.0
  %v305 = vadd.f32 %v303, %v304
  %v306 = vsel %vm245, %v287, 0.0
  %v307 = vadd.f32 %v305, %v306
  %v308 = vsel %vm245, %v288, 0.0
  %v309 = vadd.f32 %v307, %v308
  %v310 = vsel %vm245, %v289, 0.0
  %v311 = vadd.f32 %v309, %v310
  %v312 = vsel %vm245, %v290, 0.0
  %v313 = vadd.f32 %v311, %v312
  %v314 = vsel %vm245, %v291, 0.0
  %v315 = vadd.f32 %v313, %v314
  %v316 = vsel %vm245, %v292, 0.0
  %v317 = vadd.f32 %v315, %v316
  %v318 = vsel %vm245, %v293, 0.0
  %v319 = vadd.f32 %v317, %v318
  %v320 = vsel %vm245, %v294, 0.0
  %v321 = vadd.f32 %v319, %v320
  %v322 = vsel %vm245, %v295, 0.0
  %v323 = vadd.f32 %v321, %v322
  %v324 = vsel %vm245, %v296, 0.0
  %v325 = vadd.f32 %v323, %v324
  %v326 = vsel %vm245, %v297, 0.0
  %v327 = vadd.f32 %v325, %v326
  %v328 = vsel %vm245, %v298, 0.0
  %v329 = vadd.f32 %v327, %v328
  %v330 = vrot.slane %v329, 4
  %v331 = vadd.f32 %v329, %v330
  %v332 = vrot.slane %v331, 2
  %v333 = vadd.f32 %v331, %v332
  %v334 = vrot.slane %v333, 1
  %v335 = vadd.f32 %v333, %v334
  %v336 = vld [vmem:[%s3] sm:$0x1]
  %v337 = vadd.f32 %v336, %v282
  %vm338 = vcmask 57344
  %339 = vst.msk [vmem:[%s3] sm:$0x1] %vm338, %v337
  %v340 = vld [vmem:[%s4] sm:$0x1]
  %v341 = vadd.f32 %v340, %v335
  %342 = vst.msk [vmem:[%s4] sm:$0x1] %vm338, %v341
  %s343 = sadd.s32 0, 0
  %s344 = smul.u32 16, %s343
  %p345 = scmp.lt.s32.totalorder %s344, 15
  %s346 = scalar_select %p345, %s344, 15
  %s347 = smul.addr %s346, 4
  %s348 = scalar_lea.vmem %s2, %s347
  // Predicated region
  $region14: #{_lambda_.7} parent=0 // pred_check
    _
  $region15: #{_lambda_.7} parent=0 // pred_check_branch
    %350 = sbr.rel (0) target = $region17
  $region16: #{_lambda_.7} parent=0 // pred_region
    %s351 = sadd.s32 0, 0
    %s352 = smul.u32 16, %s351
  $region17: #{_lambda_.7} parent=0 // pred_fallthru
    _
  // Predicated region
  $region18: #{_lambda_.7} parent=0 // pred_check
    _
  $region19: #{_lambda_.7} parent=0 // pred_check_branch
    %354 = sbr.rel (0) target = $region21
  $region20: #{_lambda_.7} parent=0 // pred_region
    _
  $region21: #{_lambda_.7} parent=0 // pred_fallthru
    _
  // Predicated region
  $region22: #{_lambda_.7} parent=0 // pred_check
    _
  $region23: #{_lambda_.7} parent=0 // pred_check_branch
    %356 = sbr.rel (0) target = $region25
  $region24: #{_lambda_.7} parent=0 // pred_region
    _
  $region25: #{_lambda_.7} parent=0 // pred_fallthru
    _
  // Predicated region
  $region26: #{_lambda_.7} parent=0 // pred_check
    _
  $region27: #{_lambda_.7} parent=0 // pred_check_branch
    %358 = sbr.rel (0) target = $region29
  $region28: #{_lambda_.7} parent=0 // pred_region
    %s359 = sadd.s32 0, 0
    %s360 = smul.u32 16, %s359
    %p361 = scmp.lt.s32.totalorder %s360, 15
    %s362 = scalar_select %p361, %s360, 15
    %s363 = smul.addr %s362, 4
    %s364 = scalar_lea.vmem %s2, %s363
  $region29: #{_lambda_.7} parent=0 // pred_fallthru
    _
  // Predicated region
  $region30: #{_lambda_.7} parent=0 // pred_check
    _
  $region31: #{_lambda_.7} parent=0 // pred_check_branch
    %366 = sbr.rel (0) target = $region33
  $region32: #{_lambda_.7} parent=0 // pred_region
    _
  $region33: #{_lambda_.7} parent=0 // pred_fallthru
    _
  // Predicated region
  $region34: #{_lambda_.7} parent=0 // pred_check
    _
  $region35: #{_lambda_.7} parent=0 // pred_check_branch
    %368 = sbr.rel (0) target = $region37
  $region36: #{_lambda_.7} parent=0 // pred_region
    _
  $region37: #{_lambda_.7} parent=0 // pred_fallthru
    _

// kernel: _lambda_.8
$region0: #{_lambda_.8}
  #allocation0 [shape = 'u32[]', space=smem, size = 0x4, offset = 0x4, fixed_abs, tag = 'smem constant byte address 0x4 - core index']
  #allocation1 [shape = 'u32[72,128]{1,0:T(1,128)}', space=vmem, size = 0x9000, scoped, tag = 'internal scratch']
  %s0 = inlined_call_operand.vmem [shape: bf16[128,8], index: 0, kind: input, shape index: {}, may-alias: {0,3}]
  %s1 = inlined_call_operand.vmem [shape: f32[1,8], index: 1, kind: input, shape index: {}]
  %s2 = inlined_call_operand.vmem [shape: f32[1,8], index: 2, kind: input, shape index: {}]
  %s3 = inlined_call_operand.vmem [shape: bf16[128,8], index: 3, kind: output, shape index: {}, may-alias: {0,3}]
  %s4 = sld [smem:[#allocation0]]
  $region22: #{_lambda_.8} parent=0
    _
  %s6 = ssub.s32 1, %s4
  %s7 = scalar_select 0, %s6, %s4
  // Predicated region
  $region2: #{_lambda_.8} parent=0 // pred_check
    _
  $region3: #{_lambda_.8} parent=0 // pred_check_branch
    %9 = sbr.rel (0) target = $region5
  $region4: #{_lambda_.8} parent=0 // pred_region
    _
  $region5: #{_lambda_.8} parent=0 // pred_fallthru
    _
  // Predicated region
  $region6: #{_lambda_.8} parent=0 // pred_check
    _
  $region7: #{_lambda_.8} parent=0 // pred_check_branch
    %11 = sbr.rel (0) target = $region9
  $region8: #{_lambda_.8} parent=0 // pred_region
    _
  $region9: #{_lambda_.8} parent=0 // pred_fallthru
    _
  // Predicated region
  $region10: #{_lambda_.8} parent=0 // pred_check
    _
  $region11: #{_lambda_.8} parent=0 // pred_check_branch
    %13 = sbr.rel (0) target = $region13
  $region12: #{_lambda_.8} parent=0 // pred_region
    _
  $region13: #{_lambda_.8} parent=0 // pred_fallthru
    _
  %v14 = vld [vmem:[%s0] sm:$0xf]
  %v15 = vld [vmem:[%s0 + $0x4] sm:$0xf]
  %v16 = vld [vmem:[%s0 + $0x8] sm:$0xf]
  %v17 = vld [vmem:[%s0 + $0xc] sm:$0xf]
  %v18 = vld [vmem:[%s0 + $0x10] sm:$0xf]
  %v19 = vld [vmem:[%s0 + $0x14] sm:$0xf]
  %v20 = vld [vmem:[%s0 + $0x18] sm:$0xf]
  %v21 = vld [vmem:[%s0 + $0x1c] sm:$0xf]
  %v22 = vld [vmem:[%s0 + $0x20] sm:$0xf]
  %v23 = vld [vmem:[%s0 + $0x24] sm:$0xf]
  %v24 = vld [vmem:[%s0 + $0x28] sm:$0xf]
  %v25 = vld [vmem:[%s0 + $0x2c] sm:$0xf]
  %v26 = vld [vmem:[%s0 + $0x30] sm:$0xf]
  %v27 = vld [vmem:[%s0 + $0x34] sm:$0xf]
  %v28 = vld [vmem:[%s0 + $0x38] sm:$0xf]
  %v29 = vld [vmem:[%s0 + $0x3c] sm:$0xf]
  %v30 = vld [vmem:[%s1] sm:$0x1]
  %v31 = vunpack.c.l.bf16 %v14
  %v32 = vunpack.c.l.bf16 %v15
  %v33 = vunpack.c.l.bf16 %v16
  %v34 = vunpack.c.l.bf16 %v17
  %v35 = vunpack.c.l.bf16 %v18
  %v36 = vunpack.c.l.bf16 %v19
  %v37 = vunpack.c.l.bf16 %v20
  %v38 = vunpack.c.l.bf16 %v21
  %v39 = vunpack.c.l.bf16 %v22
  %v40 = vunpack.c.l.bf16 %v23
  %v41 = vunpack.c.l.bf16 %v24
  %v42 = vunpack.c.l.bf16 %v25
  %v43 = vunpack.c.l.bf16 %v26
  %v44 = vunpack.c.l.bf16 %v27
  %v45 = vunpack.c.l.bf16 %v28
  %v46 = vunpack.c.l.bf16 %v29
  %v48 = vperm.slane %v30, 0
  %v50 = vmul.f32 %v31, %v48
  %v51 = vmul.f32 %v32, %v48
  %v52 = vmul.f32 %v33, %v48
  %v53 = vmul.f32 %v34, %v48
  %v54 = vmul.f32 %v35, %v48
  %v55 = vmul.f32 %v36, %v48
  %v56 = vmul.f32 %v37, %v48
  %v57 = vmul.f32 %v38, %v48
  %v58 = vmul.f32 %v39, %v48
  %v59 = vmul.f32 %v40, %v48
  %v60 = vmul.f32 %v41, %v48
  %v61 = vmul.f32 %v42, %v48
  %v62 = vmul.f32 %v43, %v48
  %v63 = vmul.f32 %v44, %v48
  %v64 = vmul.f32 %v45, %v48
  %v65 = vmul.f32 %v46, %v48
  %v66 = vld [vmem:[%s2] sm:$0x1]
  %v68 = vperm.slane %v66, 0
  %v70 = vadd.f32 %v50, %v68
  %v71 = vadd.f32 %v51, %v68
  %v72 = vadd.f32 %v52, %v68
  %v73 = vadd.f32 %v53, %v68
  %v74 = vadd.f32 %v54, %v68
  %v75 = vadd.f32 %v55, %v68
  %v76 = vadd.f32 %v56, %v68
  %v77 = vadd.f32 %v57, %v68
  %v78 = vadd.f32 %v58, %v68
  %v79 = vadd.f32 %v59, %v68
  %v80 = vadd.f32 %v60, %v68
  %v81 = vadd.f32 %v61, %v68
  %v82 = vadd.f32 %v62, %v68
  %v83 = vadd.f32 %v63, %v68
  %v84 = vadd.f32 %v64, %v68
  %v85 = vadd.f32 %v65, %v68
  %v86 = vmax.f32 %v70, 0.0
  %v87 = vmax.f32 %v71, 0.0
  %v88 = vmax.f32 %v72, 0.0
  %v89 = vmax.f32 %v73, 0.0
  %v90 = vmax.f32 %v74, 0.0
  %v91 = vmax.f32 %v75, 0.0
  %v92 = vmax.f32 %v76, 0.0
  %v93 = vmax.f32 %v77, 0.0
  %v94 = vmax.f32 %v78, 0.0
  %v95 = vmax.f32 %v79, 0.0
  %v96 = vmax.f32 %v80, 0.0
  %v97 = vmax.f32 %v81, 0.0
  %v98 = vmax.f32 %v82, 0.0
  %v99 = vmax.f32 %v83, 0.0
  %v100 = vmax.f32 %v84, 0.0
  %v101 = vmax.f32 %v85, 0.0
  %v102 = vpack.c.bf16 %v86, %v86
  %v103 = vpack.c.bf16 %v87, %v87
  %v104 = vpack.c.bf16 %v88, %v88
  %v105 = vpack.c.bf16 %v89, %v89
  %v106 = vpack.c.bf16 %v90, %v90
  %v107 = vpack.c.bf16 %v91, %v91
  %v108 = vpack.c.bf16 %v92, %v92
  %v109 = vpack.c.bf16 %v93, %v93
  %v110 = vpack.c.bf16 %v94, %v94
  %v111 = vpack.c.bf16 %v95, %v95
  %v112 = vpack.c.bf16 %v96, %v96
  %v113 = vpack.c.bf16 %v97, %v97
  %v114 = vpack.c.bf16 %v98, %v98
  %v115 = vpack.c.bf16 %v99, %v99
  %v116 = vpack.c.bf16 %v100, %v100
  %v117 = vpack.c.bf16 %v101, %v101
  %vm118 = vcmask 60416
  %119 = vst.msk [vmem:[%s3] sm:$0xf] %vm118, %v102
  %120 = vst.msk [vmem:[%s3 + $0x4] sm:$0xf] %vm118, %v103
  %121 = vst.msk [vmem:[%s3 + $0x8] sm:$0xf] %vm118, %v104
  %122 = vst.msk [vmem:[%s3 + $0xc] sm:$0xf] %vm118, %v105
  %123 = vst.msk [vmem:[%s3 + $0x10] sm:$0xf] %vm118, %v106
  %124 = vst.msk [vmem:[%s3 + $0x14] sm:$0xf] %vm118, %v107
  %125 = vst.msk [vmem:[%s3 + $0x18] sm:$0xf] %vm118, %v108
  %126 = vst.msk [vmem:[%s3 + $0x1c] sm:$0xf] %vm118, %v109
  %127 = vst.msk [vmem:[%s3 + $0x20] sm:$0xf] %vm118, %v110
  %128 = vst.msk [vmem:[%s3 + $0x24] sm:$0xf] %vm118, %v111
  %129 = vst.msk [vmem:[%s3 + $0x28] sm:$0xf] %vm118, %v112
  %130 = vst.msk [vmem:[%s3 + $0x2c] sm:$0xf] %vm118, %v113
  %131 = vst.msk [vmem:[%s3 + $0x30] sm:$0xf] %vm118, %v114
  %132 = vst.msk [vmem:[%s3 + $0x34] sm:$0xf] %vm118, %v115
  %133 = vst.msk [vmem:[%s3 + $0x38] sm:$0xf] %vm118, %v116
  %134 = vst.msk [vmem:[%s3 + $0x3c] sm:$0xf] %vm118, %v117
  // Predicated region
  $region14: #{_lambda_.8} parent=0 // pred_check
    _
  $region15: #{_lambda_.8} parent=0 // pred_check_branch
    %136 = sbr.rel (0) target = $region17
  $region16: #{_lambda_.8} parent=0 // pred_region
    _
  $region17: #{_lambda_.8} parent=0 // pred_fallthru
    _
  // Predicated region
  $region18: #{_lambda_.8} parent=0 // pred_check
    _
  $region19: #{_lambda_.8} parent=0 // pred_check_branch
    %138 = sbr.rel (0) target = $region21
  $region20: #{_lambda_.8} parent=0 // pred_region
    _
  $region21: #{_lambda_.8} parent=0 // pred_fallthru
    _

// kernel: _lambda_.10
$region0: #{_lambda_.10}
  #allocation0 [shape = 'u32[]', space=smem, size = 0x4, offset = 0x4, fixed_abs, tag = 'smem constant byte address 0x4 - core index']
  #allocation1 [shape = 'u32[72,128]{1,0:T(1,128)}', space=vmem, size = 0x9000, scoped, tag = 'internal scratch']
  %s0 = inlined_call_operand.vmem [shape: bf16[32,16], index: 0, kind: input, shape index: {}, may-alias: {0,3}]
  %s1 = inlined_call_operand.vmem [shape: f32[1,16], index: 1, kind: input, shape index: {}]
  %s2 = inlined_call_operand.vmem [shape: f32[1,16], index: 2, kind: input, shape index: {}]
  %s3 = inlined_call_operand.vmem [shape: bf16[32,16], index: 3, kind: output, shape index: {}, may-alias: {0,3}]
  %s4 = sld [smem:[#allocation0]]
  $region22: #{_lambda_.10} parent=0
    _
  %s6 = ssub.s32 1, %s4
  %s7 = scalar_select 0, %s6, %s4
  // Predicated region
  $region2: #{_lambda_.10} parent=0 // pred_check
    _
  $region3: #{_lambda_.10} parent=0 // pred_check_branch
    %9 = sbr.rel (0) target = $region5
  $region4: #{_lambda_.10} parent=0 // pred_region
    _
  $region5: #{_lambda_.10} parent=0 // pred_fallthru
    _
  // Predicated region
  $region6: #{_lambda_.10} parent=0 // pred_check
    _
  $region7: #{_lambda_.10} parent=0 // pred_check_branch
    %11 = sbr.rel (0) target = $region9
  $region8: #{_lambda_.10} parent=0 // pred_region
    _
  $region9: #{_lambda_.10} parent=0 // pred_fallthru
    _
  // Predicated region
  $region10: #{_lambda_.10} parent=0 // pred_check
    _
  $region11: #{_lambda_.10} parent=0 // pred_check_branch
    %13 = sbr.rel (0) target = $region13
  $region12: #{_lambda_.10} parent=0 // pred_region
    _
  $region13: #{_lambda_.10} parent=0 // pred_fallthru
    _
  %v14 = vld [vmem:[%s0] sm:$0xf]
  %v15 = vld [vmem:[%s0 + $0x4] sm:$0xf]
  %v16 = vld [vmem:[%s0 + $0x8] sm:$0xf]
  %v17 = vld [vmem:[%s0 + $0xc] sm:$0xf]
  %v18 = vld [vmem:[%s1] sm:$0x1]
  %v19 = vunpack.c.l.bf16 %v14
  %v20 = vunpack.c.l.bf16 %v15
  %v21 = vunpack.c.l.bf16 %v16
  %v22 = vunpack.c.l.bf16 %v17
  %v24 = vperm.slane %v18, 0
  %v26 = vmul.f32 %v19, %v24
  %v27 = vmul.f32 %v20, %v24
  %v28 = vmul.f32 %v21, %v24
  %v29 = vmul.f32 %v22, %v24
  %v30 = vld [vmem:[%s2] sm:$0x1]
  %v32 = vperm.slane %v30, 0
  %v34 = vadd.f32 %v26, %v32
  %v35 = vadd.f32 %v27, %v32
  %v36 = vadd.f32 %v28, %v32
  %v37 = vadd.f32 %v29, %v32
  %v38 = vmax.f32 %v34, 0.0
  %v39 = vmax.f32 %v35, 0.0
  %v40 = vmax.f32 %v36, 0.0
  %v41 = vmax.f32 %v37, 0.0
  %v42 = vpack.c.bf16 %v38, %v38
  %v43 = vpack.c.bf16 %v39, %v39
  %v44 = vpack.c.bf16 %v40, %v40
  %v45 = vpack.c.bf16 %v41, %v41
  %vm46 = vcmask 125952
  %47 = vst.msk [vmem:[%s3] sm:$0xf] %vm46, %v42
  %48 = vst.msk [vmem:[%s3 + $0x4] sm:$0xf] %vm46, %v43
  %49 = vst.msk [vmem:[%s3 + $0x8] sm:$0xf] %vm46, %v44
  %50 = vst.msk [vmem:[%s3 + $0xc] sm:$0xf] %vm46, %v45
  // Predicated region
  $region14: #{_lambda_.10} parent=0 // pred_check
    _
  $region15: #{_lambda_.10} parent=0 // pred_check_branch
    %52 = sbr.rel (0) target = $region17
  $region16: #{_lambda_.10} parent=0 // pred_region
    _
  $region17: #{_lambda_.10} parent=0 // pred_fallthru
    _
  // Predicated region
  $region18: #{_lambda_.10} parent=0 // pred_check
    _
  $region19: #{_lambda_.10} parent=0 // pred_check_branch
    %54 = sbr.rel (0) target = $region21
  $region20: #{_lambda_.10} parent=0 // pred_region
    _
  $region21: #{_lambda_.10} parent=0 // pred_fallthru
    _

// kernel: _lambda_.9
$region0: #{_lambda_.9}
  #allocation0 [shape = 'u32[]', space=smem, size = 0x4, offset = 0x4, fixed_abs, tag = 'smem constant byte address 0x4 - core index']
  #allocation1 [shape = 'u32[72,128]{1,0:T(1,128)}', space=vmem, size = 0x9000, scoped, tag = 'internal scratch']
  %s0 = inlined_call_operand.vmem [shape: bf16[32,72], index: 0, kind: input, shape index: {}]
  %s1 = inlined_call_operand.vmem [shape: bf16[72,16], index: 1, kind: input, shape index: {}]
  %s2 = inlined_call_operand.vmem [shape: bf16[32,16], index: 2, kind: output, shape index: {0}]
  %s3 = inlined_call_operand.vmem [shape: f32[8,16], index: 3, kind: output, shape index: {1}]
  %s4 = inlined_call_operand.vmem [shape: f32[8,16], index: 4, kind: output, shape index: {2}]
  %5 = xla_tuple %s2, %s3, %s4
  %s6 = sld [smem:[#allocation0]]
  $region38: #{_lambda_.9} parent=0
    _
  %s8 = ssub.s32 1, %s6
  %s9 = scalar_select 0, %s8, %s6
  // Predicated region
  $region2: #{_lambda_.9} parent=0 // pred_check
    _
  $region3: #{_lambda_.9} parent=0 // pred_check_branch
    %11 = sbr.rel (0) target = $region5
  $region4: #{_lambda_.9} parent=0 // pred_region
    %s12 = sadd.s32 0, 0
    %s13 = smul.u32 4, %s12
    %p14 = scmp.lt.s32.totalorder %s13, 3
    %s15 = scalar_select %p14, %s13, 3
    %s16 = smul.addr %s15, 4
    %s17 = scalar_lea.vmem %s0, %s16
    %s18 = sadd.s32 0, 0
    %s19 = smul.u32 4, %s18
  $region5: #{_lambda_.9} parent=0 // pred_fallthru
    _
  // Predicated region
  $region6: #{_lambda_.9} parent=0 // pred_check
    _
  $region7: #{_lambda_.9} parent=0 // pred_check_branch
    %21 = sbr.rel (0) target = $region9
  $region8: #{_lambda_.9} parent=0 // pred_region
    _
  $region9: #{_lambda_.9} parent=0 // pred_fallthru
    _
  %s22 = sadd.s32 0, 0
  %s23 = smul.u32 4, %s22
  %p24 = scmp.lt.s32.totalorder %s23, 3
  %s25 = scalar_select %p24, %s23, 3
  %s26 = smul.addr %s25, 4
  %s27 = scalar_lea.vmem %s0, %s26
  %s28 = sadd.s32 0, 0
  %s29 = smul.u32 4, %s28
  %p30 = scmp.lt.s32.totalorder %s29, 3
  %s31 = scalar_select %p30, %s29, 3
  %s32 = smul.addr %s31, 4
  %s33 = scalar_lea.vmem %s2, %s32
  %s34 = sadd.s32 0, 0
  %s35 = smul.u32 4, %s34
  %p36 = scmp.lt.s32.totalorder %s35, 3
  %s37 = scalar_select %p36, %s35, 3
  %s38 = smul.addr %s37, 4
  %s39 = scalar_lea.vmem %s0, %s38
  %s40 = sadd.s32 0, 0
  %s41 = smul.u32 4, %s40
  %s42 = sadd.s32 0, 0
  %s43 = smul.u32 4, %s42
  %p44 = scmp.lt.s32.totalorder %s43, 3
  %s45 = scalar_select %p44, %s43, 3
  %s46 = smul.addr %s45, 4
  %s47 = scalar_lea.vmem %s2, %s46
  %s48 = sadd.s32 0, 0
  %s49 = smul.u32 4, %s48
  %v51 = vld [vmem:[%s39] sm:$0xf]
  %v52 = vld [vmem:[%s39 + $0x4] sm:$0xf]
  %v53 = vld [vmem:[%s39 + $0x8] sm:$0xf]
  %v54 = vld [vmem:[%s39 + $0xc] sm:$0xf]
  %v55 = vld [vmem:[%s1] sm:$0xf]
  %v56 = vld [vmem:[%s1 + $0x4] sm:$0xf]
  %v57 = vld [vmem:[%s1 + $0x8] sm:$0xf]
  %v58 = vld [vmem:[%s1 + $0xc] sm:$0xf]
  %v59 = vld [vmem:[%s1 + $0x10] sm:$0xf]
  %v60 = vld [vmem:[%s1 + $0x14] sm:$0xf]
  %v61 = vld [vmem:[%s1 + $0x18] sm:$0xf]
  %v62 = vld [vmem:[%s1 + $0x1c] sm:$0xf]
  %v63 = vld [vmem:[%s1 + $0x20] sm:$0xf]
  %v68 = vunpack.c.l.b16 %v51
  %v69 = vunpack.c.l.b16 %v52
  %v70 = vunpack.c.l.b16 %v53
  %v71 = vunpack.c.l.b16 %v54
  %v72 = vpack.c.b16 %v69, %v68
  %v73 = vpack.c.b16 %v71, %v70
  %v83 = vunpack.c.l.b16 %v55
  %v84 = vunpack.c.l.b16 %v56
  %v85 = vunpack.c.l.b16 %v57
  %v86 = vunpack.c.l.b16 %v58
  %v87 = vunpack.c.l.b16 %v59
  %v88 = vunpack.c.l.b16 %v60
  %v89 = vunpack.c.l.b16 %v61
  %v90 = vunpack.c.l.b16 %v62
  %v91 = vunpack.c.l.b16 %v63
  %v92 = vpack.c.b16 %v84, %v83
  %v93 = vpack.c.b16 %v86, %v85
  %v94 = vpack.c.b16 %v88, %v87
  %v95 = vpack.c.b16 %v90, %v89
  %v96 = vpack.c.b16 %v91, %v91
  %vm101 = vcmask 588800
  %v103 = vsel %vm101, %v72, 0
  %v106 = vsel %vm101, %v73, 0
  %vm108 = vcmask 1043456
  %v110 = vsel %vm108, %v96, 0
  %112 = vmatpush.bf16.msra.mxu0 0
  %113 = vmatpush.bf16.msra.mxu0 0
  %114 = vmatpush.bf16.msra.mxu0 0
  %115 = vmatpush.bf16.msra.mxu0 %v110
  %116 = vmatpush.bf16.msra.mxu0 %v95
  %117 = vmatpush.bf16.msra.mxu0 %v94
  %118 = vmatpush.bf16.msra.mxu0 %v93
  %119 = vmatpush.bf16.msra.mxu0 %v92
  %120 = vmatmul.bf16.gmra.mxu0 %v103
  %v121 = vpop.f32.mrf.mxu0
  %v122 = vadd.f32 0.0, %v121
  %v123 = vpop.f32.mrf.mxu0
  %v124 = vadd.f32 0.0, %v123
  %125 = vmatmul.bf16.gmra.mxu0 %v106
  %v126 = vpop.f32.mrf.mxu0
  %v127 = vadd.f32 0.0, %v126
  %v128 = vpop.f32.mrf.mxu0
  %v129 = vadd.f32 0.0, %v128
  %130 = vdwg.mxu0
  %v131 = vpack.c.bf16 %v122, %v122
  %v132 = vpack.c.bf16 %v124, %v124
  %v133 = vpack.c.bf16 %v127, %v127
  %v134 = vpack.c.bf16 %v129, %v129
  %vm135 = vcmask 125952
  %136 = vst.msk [vmem:[%s47] sm:$0xf] %vm135, %v131
  %137 = vst.msk [vmem:[%s47 + $0x4] sm:$0xf] %vm135, %v132
  %138 = vst.msk [vmem:[%s47 + $0x8] sm:$0xf] %vm135, %v133
  %139 = vst.msk [vmem:[%s47 + $0xc] sm:$0xf] %vm135, %v134
  %p140 = scmp.eq.s32.totalorder 0, 0
  // Predicated region
  $region10: #{_lambda_.9} parent=0 // pred_check
    %p141 = pneg %p140
  $region11: #{_lambda_.9} parent=0 // pred_check_branch
    %143 = sbr.rel (%p141) target = $region13
  $region12: #{_lambda_.9} parent=0 // pred_region
    %vm144 = vcmask 130048
    %145 = vst.msk [vmem:[%s3] sm:$0xff] %vm144, 0.0
    %146 = vst.msk [vmem:[%s4] sm:$0xff] %vm144, 0.0
  $region13: #{_lambda_.9} parent=0 // pred_fallthru
    _
  %vm147 = vcmask 130048
  %v148 = vsel %vm147, %v122, 0.0
  %v149 = vsel %vm147, %v124, 0.0
  %v150 = vadd.f32 %v148, %v149
  %v151 = vsel %vm147, %v127, 0.0
  %v152 = vadd.f32 %v150, %v151
  %v153 = vsel %vm147, %v129, 0.0
  %v154 = vadd.f32 %v152, %v153
  %v155 = vrot.slane %v154, 4
  %v156 = vadd.f32 %v154, %v155
  %v157 = vrot.slane %v156, 2
  %v158 = vadd.f32 %v156, %v157
  %v159 = vrot.slane %v158, 1
  %v160 = vadd.f32 %v158, %v159
  %v161 = vmul.f32 %v122, %v122
  %v162 = vmul.f32 %v124, %v124
  %v163 = vmul.f32 %v127, %v127
  %v164 = vmul.f32 %v129, %v129
  %v165 = vsel %vm147, %v161, 0.0
  %v166 = vsel %vm147, %v162, 0.0
  %v167 = vadd.f32 %v165, %v166
  %v168 = vsel %vm147, %v163, 0.0
  %v169 = vadd.f32 %v167, %v168
  %v170 = vsel %vm147, %v164, 0.0
  %v171 = vadd.f32 %v169, %v170
  %v172 = vrot.slane %v171, 4
  %v173 = vadd.f32 %v171, %v172
  %v174 = vrot.slane %v173, 2
  %v175 = vadd.f32 %v173, %v174
  %v176 = vrot.slane %v175, 1
  %v177 = vadd.f32 %v175, %v176
  %v178 = vld [vmem:[%s3] sm:$0x1]
  %v179 = vadd.f32 %v178, %v160
  %vm180 = vcmask 122880
  %181 = vst.msk [vmem:[%s3] sm:$0x1] %vm180, %v179
  %v182 = vld [vmem:[%s4] sm:$0x1]
  %v183 = vadd.f32 %v182, %v177
  %184 = vst.msk [vmem:[%s4] sm:$0x1] %vm180, %v183
  %s185 = sadd.s32 0, 0
  %s186 = smul.u32 4, %s185
  %p187 = scmp.lt.s32.totalorder %s186, 3
  %s188 = scalar_select %p187, %s186, 3
  %s189 = smul.addr %s188, 4
  %s190 = scalar_lea.vmem %s2, %s189
  // Predicated region
  $region14: #{_lambda_.9} parent=0 // pred_check
    _
  $region15: #{_lambda_.9} parent=0 // pred_check_branch
    %192 = sbr.rel (0) target = $region17
  $region16: #{_lambda_.9} parent=0 // pred_region
    %s193 = sadd.s32 0, 0
    %s194 = smul.u32 4, %s193
  $region17: #{_lambda_.9} parent=0 // pred_fallthru
    _
  // Predicated region
  $region18: #{_lambda_.9} parent=0 // pred_check
    _
  $region19: #{_lambda_.9} parent=0 // pred_check_branch
    %196 = sbr.rel (0) target = $region21
  $region20: #{_lambda_.9} parent=0 // pred_region
    _
  $region21: #{_lambda_.9} parent=0 // pred_fallthru
    _
  // Predicated region
  $region22: #{_lambda_.9} parent=0 // pred_check
    _
  $region23: #{_lambda_.9} parent=0 // pred_check_branch
    %198 = sbr.rel (0) target = $region25
  $region24: #{_lambda_.9} parent=0 // pred_region
    _
  $region25: #{_lambda_.9} parent=0 // pred_fallthru
    _
  // Predicated region
  $region26: #{_lambda_.9} parent=0 // pred_check
    _
  $region27: #{_lambda_.9} parent=0 // pred_check_branch
    %200 = sbr.rel (0) target = $region29
  $region28: #{_lambda_.9} parent=0 // pred_region
    %s201 = sadd.s32 0, 0
    %s202 = smul.u32 4, %s201
    %p203 = scmp.lt.s32.totalorder %s202, 3
    %s204 = scalar_select %p203, %s202, 3
    %s205 = smul.addr %s204, 4
    %s206 = scalar_lea.vmem %s2, %s205
  $region29: #{_lambda_.9} parent=0 // pred_fallthru
    _
  // Predicated region
  $region30: #{_lambda_.9} parent=0 // pred_check
    _
  $region31: #{_lambda_.9} parent=0 // pred_check_branch
    %208 = sbr.rel (0) target = $region33
  $region32: #{_lambda_.9} parent=0 // pred_region
    _
  $region33: #{_lambda_.9} parent=0 // pred_fallthru
    _
  // Predicated region
  $region34: #{_lambda_.9} parent=0 // pred_check
    _
  $region35: #{_lambda_.9} parent=0 // pred_check_branch
    %210 = sbr.rel (0) target = $region37
  $region36: #{_lambda_.9} parent=0 // pred_region
    _
  $region37: #{_lambda_.9} parent=0 // pred_fallthru
    _

// kernel: _lambda_.11
$region0: #{_lambda_.11}
  #allocation0 [shape = 'u32[]', space=smem, size = 0x4, offset = 0x4, fixed_abs, tag = 'smem constant byte address 0x4 - core index']
  #allocation1 [shape = 'u32[72,128]{1,0:T(1,128)}', space=vmem, size = 0x9000, scoped, tag = 'internal scratch']
  #allocation2 [shape = 'f32[2,128]{1,0:T(2,128)}', space=vmem, size = 0x400, scoped, tag = 'scratch operand']
  %s0 = inlined_call_operand.vmem [shape: bf16[2,256], index: 0, kind: input, shape index: {}]
  %s1 = inlined_call_operand.vmem [shape: bf16[256,128], index: 1, kind: input, shape index: {}]
  %s2 = inlined_call_operand.vmem [shape: f32[1,128], index: 2, kind: input, shape index: {}]
  %s3 = inlined_call_operand.vmem [shape: bf16[128,256], index: 3, kind: input, shape index: {}]
  %s4 = inlined_call_operand.vmem [shape: f32[1,256], index: 4, kind: input, shape index: {}]
  %s5 = inlined_call_operand.vmem [shape: f32[2,128], index: 5, kind: input, shape index: {}]
  %s6 = inlined_call_operand.hbm [shape: f32[2,128], index: 6, kind: output, shape index: {0}]
  %s7 = inlined_call_operand.hbm [shape: f32[2,128], index: 7, kind: output, shape index: {1}]
  %s8 = inlined_call_operand.hbm [shape: f32[2,128], index: 8, kind: output, shape index: {2}]
  %9 = xla_tuple %s6, %s7, %s8
  %s10 = sld [smem:[#allocation0]]
  $region58: #{_lambda_.11} parent=0
    _
  %s12 = ssub.s32 1, %s10
  %s13 = scalar_select 0, %s12, %s10
  $region1: #{_lambda_.11} parent=0
    #allocation3 [shape = 'u8[1024]{0}', space=vmem, size = 0x400, scoped, tag = 'output window, operand 0, single buffered']
    #allocation4 [shape = 's32[1]{0}', space=sflag, size = 0x4, scoped, tag = 'scoped memory for _lambda_.11']
    #allocation5 [shape = 'u8[1024]{0}', space=vmem, size = 0x400, scoped, tag = 'output window, operand 1, single buffered']
    #allocation6 [shape = 's32[1]{0}', space=sflag, size = 0x4, scoped, tag = 'scoped memory for _lambda_.11']
    #allocation7 [shape = 'u8[1024]{0}', space=vmem, size = 0x400, scoped, tag = 'output window, operand 2, single buffered']
    %14 = vsyncpa [#allocation4], 0
    %15 = vsyncpa [#allocation6], 0
    // Predicated region
    $region2: #{_lambda_.11} parent=1 // pred_check
      _
    $region3: #{_lambda_.11} parent=1 // pred_check_branch
      %17 = sbr.rel (0) target = $region5
    $region4: #{_lambda_.11} parent=1 // pred_region
      _
    $region5: #{_lambda_.11} parent=1 // pred_fallthru
      _
    // Predicated region
    $region6: #{_lambda_.11} parent=1 // pred_check
      _
    $region7: #{_lambda_.11} parent=1 // pred_check_branch
      %19 = sbr.rel (0) target = $region9
    $region8: #{_lambda_.11} parent=1 // pred_region
      _
    $region9: #{_lambda_.11} parent=1 // pred_fallthru
      _
    // Predicated region
    $region10: #{_lambda_.11} parent=1 // pred_check
      _
    $region11: #{_lambda_.11} parent=1 // pred_check_branch
      %21 = sbr.rel (0) target = $region13
    $region12: #{_lambda_.11} parent=1 // pred_region
      _
    $region13: #{_lambda_.11} parent=1 // pred_fallthru
      _
    // Predicated region
    $region14: #{_lambda_.11} parent=1 // pred_check
      _
    $region15: #{_lambda_.11} parent=1 // pred_check_branch
      %23 = sbr.rel (0) target = $region17
    $region16: #{_lambda_.11} parent=1 // pred_region
      _
    $region17: #{_lambda_.11} parent=1 // pred_fallthru
      _
    // Predicated region
    $region18: #{_lambda_.11} parent=1 // pred_check
      _
    $region19: #{_lambda_.11} parent=1 // pred_check_branch
      %25 = sbr.rel (0) target = $region21
    $region20: #{_lambda_.11} parent=1 // pred_region
      _
    $region21: #{_lambda_.11} parent=1 // pred_fallthru
      _
    // Predicated region
    $region22: #{_lambda_.11} parent=1 // pred_check
      _
    $region23: #{_lambda_.11} parent=1 // pred_check_branch
      %27 = sbr.rel (0) target = $region25
    $region24: #{_lambda_.11} parent=1 // pred_region
      _
    $region25: #{_lambda_.11} parent=1 // pred_fallthru
      _
    %p28 = scmp.eq.s32.totalorder 0, 0
    // Predicated region
    $region26: #{_lambda_.11} parent=1 // pred_check
      %p29 = pneg %p28
    $region27: #{_lambda_.11} parent=1 // pred_check_branch
      %31 = sbr.rel (%p29) target = $region29
    $region28: #{_lambda_.11} parent=1 // pred_region
      %32 = vst [vmem:[#allocation2] sm:$0x3] 0.0
    $region29: #{_lambda_.11} parent=1 // pred_fallthru
      _
    %v33 = vld [vmem:[#allocation2] sm:$0x3]
    %v34 = vld [vmem:[%s0] sm:$0x3]
    %v35 = vld [vmem:[%s1] sm:$0xf]
    %v36 = vld [vmem:[%s1 + $0x4] sm:$0xf]
    %v37 = vld [vmem:[%s1 + $0x8] sm:$0xf]
    %v38 = vld [vmem:[%s1 + $0xc] sm:$0xf]
    %v39 = vld [vmem:[%s1 + $0x10] sm:$0xf]
    %v40 = vld [vmem:[%s1 + $0x14] sm:$0xf]
    %v41 = vld [vmem:[%s1 + $0x18] sm:$0xf]
    %v42 = vld [vmem:[%s1 + $0x1c] sm:$0xf]
    %v43 = vld [vmem:[%s1 + $0x20] sm:$0xf]
    %v44 = vld [vmem:[%s1 + $0x24] sm:$0xf]
    %v45 = vld [vmem:[%s1 + $0x28] sm:$0xf]
    %v46 = vld [vmem:[%s1 + $0x2c] sm:$0xf]
    %v47 = vld [vmem:[%s1 + $0x30] sm:$0xf]
    %v48 = vld [vmem:[%s1 + $0x34] sm:$0xf]
    %v49 = vld [vmem:[%s1 + $0x38] sm:$0xf]
    %v50 = vld [vmem:[%s1 + $0x3c] sm:$0xf]
    %v51 = vld [vmem:[%s1 + $0x40] sm:$0xf]
    %v52 = vld [vmem:[%s1 + $0x44] sm:$0xf]
    %v53 = vld [vmem:[%s1 + $0x48] sm:$0xf]
    %v54 = vld [vmem:[%s1 + $0x4c] sm:$0xf]
    %v55 = vld [vmem:[%s1 + $0x50] sm:$0xf]
    %v56 = vld [vmem:[%s1 + $0x54] sm:$0xf]
    %v57 = vld [vmem:[%s1 + $0x58] sm:$0xf]
    %v58 = vld [vmem:[%s1 + $0x5c] sm:$0xf]
    %v59 = vld [vmem:[%s1 + $0x60] sm:$0xf]
    %v60 = vld [vmem:[%s1 + $0x64] sm:$0xf]
    %v61 = vld [vmem:[%s1 + $0x68] sm:$0xf]
    %v62 = vld [vmem:[%s1 + $0x6c] sm:$0xf]
    %v63 = vld [vmem:[%s1 + $0x70] sm:$0xf]
    %v64 = vld [vmem:[%s1 + $0x74] sm:$0xf]
    %v65 = vld [vmem:[%s1 + $0x78] sm:$0xf]
    %v66 = vld [vmem:[%s1 + $0x7c] sm:$0xf]
    %68 = vst [vmem:[#allocation1] ss:$9 sm:$0xff] %v34
    %v69 = vld [vmem:[#allocation1] sm:$0xff]
    %v70 = vld [vmem:[#allocation1 + $0x9] sm:$0xff]
    %v105 = vunpack.c.l.b16 %v35
    %v106 = vunpack.c.l.b16 %v36
    %v107 = vunpack.c.l.b16 %v37
    %v108 = vunpack.c.l.b16 %v38
    %v109 = vunpack.c.l.b16 %v39
    %v110 = vunpack.c.l.b16 %v40
    %v111 = vunpack.c.l.b16 %v41
    %v112 = vunpack.c.l.b16 %v42
    %v113 = vunpack.c.l.b16 %v43
    %v114 = vunpack.c.l.b16 %v44
    %v115 = vunpack.c.l.b16 %v45
    %v116 = vunpack.c.l.b16 %v46
    %v117 = vunpack.c.l.b16 %v47
    %v118 = vunpack.c.l.b16 %v48
    %v119 = vunpack.c.l.b16 %v49
    %v120 = vunpack.c.l.b16 %v50
    %v121 = vunpack.c.l.b16 %v51
    %v122 = vunpack.c.l.b16 %v52
    %v123 = vunpack.c.l.b16 %v53
    %v124 = vunpack.c.l.b16 %v54
    %v125 = vunpack.c.l.b16 %v55
    %v126 = vunpack.c.l.b16 %v56
    %v127 = vunpack.c.l.b16 %v57
    %v128 = vunpack.c.l.b16 %v58
    %v129 = vunpack.c.l.b16 %v59
    %v130 = vunpack.c.l.b16 %v60
    %v131 = vunpack.c.l.b16 %v61
    %v132 = vunpack.c.l.b16 %v62
    %v133 = vunpack.c.l.b16 %v63
    %v134 = vunpack.c.l.b16 %v64
    %v135 = vunpack.c.l.b16 %v65
    %v136 = vunpack.c.l.b16 %v66
    %v137 = vpack.c.b16 %v106, %v105
    %v138 = vpack.c.b16 %v108, %v107
    %v139 = vpack.c.b16 %v110, %v109
    %v140 = vpack.c.b16 %v112, %v111
    %v141 = vpack.c.b16 %v114, %v113
    %v142 = vpack.c.b16 %v116, %v115
    %v143 = vpack.c.b16 %v118, %v117
    %v144 = vpack.c.b16 %v120, %v119
    %v145 = vpack.c.b16 %v122, %v121
    %v146 = vpack.c.b16 %v124, %v123
    %v147 = vpack.c.b16 %v126, %v125
    %v148 = vpack.c.b16 %v128, %v127
    %v149 = vpack.c.b16 %v130, %v129
    %v150 = vpack.c.b16 %v132, %v131
    %v151 = vpack.c.b16 %v134, %v133
    %v152 = vpack.c.b16 %v136, %v135
    %169 = vmatpush.bf16.msra.mxu0 %v144
    %170 = vmatpush.bf16.msra.mxu0 %v143
    %171 = vmatpush.bf16.msra.mxu0 %v142
    %172 = vmatpush.bf16.msra.mxu0 %v141
    %173 = vmatpush.bf16.msra.mxu0 %v140
    %174 = vmatpush.bf16.msra.mxu0 %v139
    %175 = vmatpush.bf16.msra.mxu0 %v138
    %176 = vmatpush.bf16.msra.mxu0 %v137
    %177 = vmatmul.bf16.gmra.mxu0 %v69
    %v178 = vpop.f32.mrf.mxu0
    %v179 = vadd.f32 0.0, %v178
    %v180 = vpop.f32.mrf.mxu0
    %181 = vdwg.mxu0
    %182 = vmatpush.bf16.msra.mxu0 %v152
    %183 = vmatpush.bf16.msra.mxu0 %v151
    %184 = vmatpush.bf16.msra.mxu0 %v150
    %185 = vmatpush.bf16.msra.mxu0 %v149
    %186 = vmatpush.bf16.msra.mxu0 %v148
    %187 = vmatpush.bf16.msra.mxu0 %v147
    %188 = vmatpush.bf16.msra.mxu0 %v146
    %189 = vmatpush.bf16.msra.mxu0 %v145
    %190 = vmatmul.bf16.gmra.mxu0 %v70
    %v191 = vpop.f32.mrf.mxu0
    %v192 = vadd.f32 %v179, %v191
    %v193 = vpop.f32.mrf.mxu0
    %194 = vdwg.mxu0
    %v195 = vadd.f32 %v33, %v192
    %196 = vst [vmem:[#allocation2] sm:$0x3] %v195
    // Predicated region
    $region30: #{_lambda_.11} parent=1 // pred_check
      %p197 = pneg %p28
    $region31: #{_lambda_.11} parent=1 // pred_check_branch
      %199 = sbr.rel (%p197) target = $region33
    $region32: #{_lambda_.11} parent=1 // pred_region
      %v200 = vld [vmem:[#allocation2] sm:$0x3]
      %v201 = vld [vmem:[%s2] sm:$0x1]
      %v203 = vperm.slane %v201, 0
      %v205 = vadd.f32 %v200, %v203
      %v206 = vmax.f32 %v205, 0.0
      %v207 = vpack.c.bf16 %v206, %v206
      %v208 = vld [vmem:[%s3] sm:$0xff]
      %v209 = vld [vmem:[%s3 + $0x8] sm:$0xff]
      %v210 = vld [vmem:[%s3 + $0x10] sm:$0xff]
      %v211 = vld [vmem:[%s3 + $0x18] sm:$0xff]
      %v212 = vld [vmem:[%s3 + $0x20] sm:$0xff]
      %v213 = vld [vmem:[%s3 + $0x28] sm:$0xff]
      %v214 = vld [vmem:[%s3 + $0x30] sm:$0xff]
      %v215 = vld [vmem:[%s3 + $0x38] sm:$0xff]
      %v216 = vld [vmem:[%s3 + $0x40] sm:$0xff]
      %v217 = vld [vmem:[%s3 + $0x48] sm:$0xff]
      %v218 = vld [vmem:[%s3 + $0x50] sm:$0xff]
      %v219 = vld [vmem:[%s3 + $0x58] sm:$0xff]
      %v220 = vld [vmem:[%s3 + $0x60] sm:$0xff]
      %v221 = vld [vmem:[%s3 + $0x68] sm:$0xff]
      %v222 = vld [vmem:[%s3 + $0x70] sm:$0xff]
      %v223 = vld [vmem:[%s3 + $0x78] sm:$0xff]
      %v224 = vld [vmem:[%s4] sm:$0x3]
      %v226 = vperm.slane %v224, 0
      %v227 = vperm.slane %v224, 1
      %v246 = vunpack.c.l.b16 %v208
      %v247 = vunpack.c.h.b16 %v208
      %v248 = vunpack.c.l.b16 %v209
      %v249 = vunpack.c.h.b16 %v209
      %v250 = vunpack.c.l.b16 %v210
      %v251 = vunpack.c.h.b16 %v210
      %v252 = vunpack.c.l.b16 %v211
      %v253 = vunpack.c.h.b16 %v211
      %v254 = vunpack.c.l.b16 %v212
      %v255 = vunpack.c.h.b16 %v212
      %v256 = vunpack.c.l.b16 %v213
      %v257 = vunpack.c.h.b16 %v213
      %v258 = vunpack.c.l.b16 %v214
      %v259 = vunpack.c.h.b16 %v214
      %v260 = vunpack.c.l.b16 %v215
      %v261 = vunpack.c.h.b16 %v215
      %v262 = vunpack.c.l.b16 %v216
      %v263 = vunpack.c.h.b16 %v216
      %v264 = vunpack.c.l.b16 %v217
      %v265 = vunpack.c.h.b16 %v217
      %v266 = vunpack.c.l.b16 %v218
      %v267 = vunpack.c.h.b16 %v218
      %v268 = vunpack.c.l.b16 %v219
      %v269 = vunpack.c.h.b16 %v219
      %v270 = vunpack.c.l.b16 %v220
      %v271 = vunpack.c.h.b16 %v220
      %v272 = vunpack.c.l.b16 %v221
      %v273 = vunpack.c.h.b16 %v221
      %v274 = vunpack.c.l.b16 %v222
      %v275 = vunpack.c.h.b16 %v222
      %v276 = vunpack.c.l.b16 %v223
      %v277 = vunpack.c.h.b16 %v223
      %v278 = vpack.c.b16 %v248, %v246
      %v279 = vpack.c.b16 %v249, %v247
      %v280 = vpack.c.b16 %v252, %v250
      %v281 = vpack.c.b16 %v253, %v251
      %v282 = vpack.c.b16 %v256, %v254
      %v283 = vpack.c.b16 %v257, %v255
      %v284 = vpack.c.b16 %v260, %v258
      %v285 = vpack.c.b16 %v261, %v259
      %v286 = vpack.c.b16 %v264, %v262
      %v287 = vpack.c.b16 %v265, %v263
      %v288 = vpack.c.b16 %v268, %v266
      %v289 = vpack.c.b16 %v269, %v267
      %v290 = vpack.c.b16 %v272, %v270
      %v291 = vpack.c.b16 %v273, %v271
      %v292 = vpack.c.b16 %v276, %v274
      %v293 = vpack.c.b16 %v277, %v275
      %310 = vmatpush.bf16.msra.mxu0 %v292
      %311 = vmatpush.bf16.msra.mxu0 %v290
      %312 = vmatpush.bf16.msra.mxu0 %v288
      %313 = vmatpush.bf16.msra.mxu0 %v286
      %314 = vmatpush.bf16.msra.mxu0 %v284
      %315 = vmatpush.bf16.msra.mxu0 %v282
      %316 = vmatpush.bf16.msra.mxu0 %v280
      %317 = vmatpush.bf16.msra.mxu0 %v278
      %318 = vmatmul.bf16.gmra.mxu0 %v207
      %v319 = vpop.f32.mrf.mxu0
      %v320 = vadd.f32 %v226, %v319
      %v321 = vpop.f32.mrf.mxu0
      %322 = vdwg.mxu0
      %323 = vmatpush.bf16.msra.mxu0 %v293
      %324 = vmatpush.bf16.msra.mxu0 %v291
      %325 = vmatpush.bf16.msra.mxu0 %v289
      %326 = vmatpush.bf16.msra.mxu0 %v287
      %327 = vmatpush.bf16.msra.mxu0 %v285
      %328 = vmatpush.bf16.msra.mxu0 %v283
      %329 = vmatpush.bf16.msra.mxu0 %v281
      %330 = vmatpush.bf16.msra.mxu0 %v279
      %331 = vmatmul.bf16.gmra.mxu0 %v207
      %v332 = vpop.f32.mrf.mxu0
      %v333 = vadd.f32 %v227, %v332
      %v334 = vpop.f32.mrf.mxu0
      %335 = vdwg.mxu0
      %v336 = vmul.f32 %v333, 1.442695
      %v337 = vpow.pop %v336
      %338 = vst [vmem:[#allocation5] sm:$0x3] %v320
      %339 = vst [vmem:[#allocation7] sm:$0x3] %v337
      %v340 = vld [vmem:[%s5] sm:$0x3]
      %v341 = vmul.f32 %v340, %v337
      %v342 = vadd.f32 %v320, %v341
      %343 = vst [vmem:[#allocation3] sm:$0x3] %v342
    $region33: #{_lambda_.11} parent=1 // pred_fallthru
      _
    // Predicated region
    $region34: #{_lambda_.11} parent=1 // pred_check
      _
    $region35: #{_lambda_.11} parent=1 // pred_check_branch
      %345 = sbr.rel (0) target = $region37
    $region36: #{_lambda_.11} parent=1 // pred_region
      %347 = vsyncadd [#allocation4], 0
      %s349 = sshll.u32 [#allocation3], 4
      %s350 = int_to_ptr.vmem [resolvable:$true] %s349
      %s351 = sshll.u32 %s6, 4
      %s352 = int_to_ptr.hbm [resolvable:$true] %s351
      %354 = dma.vmem_to_hbm [thread:$0]  %s350, 32, %s352, [#allocation4]
    $region37: #{_lambda_.11} parent=1 // pred_fallthru
      _
    // Predicated region
    $region38: #{_lambda_.11} parent=1 // pred_check
      _
    $region39: #{_lambda_.11} parent=1 // pred_check_branch
      %356 = sbr.rel (0) target = $region41
    $region40: #{_lambda_.11} parent=1 // pred_region
      %358 = vsyncadd [#allocation6], 0
      %s360 = sshll.u32 [#allocation5], 4
      %s361 = int_to_ptr.vmem [resolvable:$true] %s360
      %s362 = sshll.u32 %s7, 4
      %s363 = int_to_ptr.hbm [resolvable:$true] %s362
      %365 = dma.vmem_to_hbm [thread:$0]  %s361, 32, %s363, [#allocation6]
    $region41: #{_lambda_.11} parent=1 // pred_fallthru
      _
    // Predicated region
    $region42: #{_lambda_.11} parent=1 // pred_check
      _
    $region43: #{_lambda_.11} parent=1 // pred_check_branch
      %367 = sbr.rel (0) target = $region45
    $region44: #{_lambda_.11} parent=1 // pred_region
      %369 = vsyncadd [#allocation6], 0
      %s371 = sshll.u32 [#allocation7], 4
      %s372 = int_to_ptr.vmem [resolvable:$true] %s371
      %s373 = sshll.u32 %s8, 4
      %s374 = int_to_ptr.hbm [resolvable:$true] %s373
      %376 = dma.vmem_to_hbm [thread:$0]  %s372, 32, %s374, [#allocation6]
    $region45: #{_lambda_.11} parent=1 // pred_fallthru
      _
    // Predicated region
    $region46: #{_lambda_.11} parent=1 // pred_check
      _
    $region47: #{_lambda_.11} parent=1 // pred_check_branch
      %378 = sbr.rel (0) target = $region49
    $region48: #{_lambda_.11} parent=1 // pred_region
      %380 = dma.done [#allocation4], 32
    $region49: #{_lambda_.11} parent=1 // pred_fallthru
      _
    // Predicated region
    $region50: #{_lambda_.11} parent=1 // pred_check
      _
    $region51: #{_lambda_.11} parent=1 // pred_check_branch
      %382 = sbr.rel (0) target = $region53
    $region52: #{_lambda_.11} parent=1 // pred_region
      %384 = dma.done [#allocation6], 32
    $region53: #{_lambda_.11} parent=1 // pred_fallthru
      _
    // Predicated region
    $region54: #{_lambda_.11} parent=1 // pred_check
      _
    $region55: #{_lambda_.11} parent=1 // pred_check_branch
      %386 = sbr.rel (0) target = $region57
    $region56: #{_lambda_.11} parent=1 // pred_region
      %388 = dma.done [#allocation6], 32
    $region57: #{_lambda_.11} parent=1 // pred_fallthru
      _
    %389 = vsyncpa [#allocation4], 1
    %390 = vsyncpa [#allocation6], 1

</llo_original>
